<compile_context>
chip_gen: v7x
topology: tpu7x:2x2x1
jax: 0.10.0
libtpu: 0.0.40
codegen_flags: <defaults>
</compile_context>

<pallas_src>
import functools
import math

import jax
import jax.numpy as jnp
from jax import lax
from jax.experimental import pallas as pl
from jax.experimental.pallas import tpu as pltpu


# ---------------------------------------------------------------------------
# Fused encoder-layer kernel (one grid step == one batch element)
# ---------------------------------------------------------------------------

def _encoder_layer_kernel(
    src_ref, bert_ref,            # (L, E) each (batch dim squeezed by BlockSpec)
    w_qkv_ref, b_qkv_ref,         # (E, 3E), (1, 3E)
    w_o_ref, b_o_ref,             # (E, E),  (1, E)
    w1_ref, b1_ref,               # (E, FF), (1, FF)
    w2_ref, b2_ref,               # (FF, E), (1, E)
    g1_ref, be1_ref,              # (1, E), (1, E)
    g2_ref, be2_ref,              # (1, E), (1, E)
    o_ref,                        # (L, E)
    *, nhead, eps,
):
    L, E = src_ref.shape
    H = nhead
    hd = E // H
    scale = 1.0 / math.sqrt(hd)

    x = src_ref[...].astype(jnp.float32)       # (L, E)
    b = bert_ref[...].astype(jnp.float32)      # (L, E)

    # ---- fused QKV projection: src and bert in one MXU pass (lane dim = 3E) ----
    xb = jnp.concatenate([x, b], axis=0)                              # (2L, E)
    qkv = jnp.dot(xb, w_qkv_ref[...], preferred_element_type=jnp.float32)
    qkv = qkv + b_qkv_ref[...]                                        # (2L, 3E)

    q = qkv[:L, :E] * scale            # src queries (bert queries are unused)
    k_all = qkv[:, E:2 * E]            # rows [:L] = src keys,   [L:] = bert keys
    v_all = qkv[:, 2 * E:]             # rows [:L] = src values, [L:] = bert values

    head_outs = []
    for h in range(H):                 # static unroll, H is small
        sl = slice(h * hd, (h + 1) * hd)
        q_h = q[:, sl]                 # (L, hd)
        k_h = k_all[:, sl]             # (2L, hd)
        v_h = v_all[:, sl]             # (2L, hd)

        # One score matmul serves both branches (no k.T materialization):
        # columns [:L] = self-attention scores, columns [L:] = src->bert scores.
        s = lax.dot_general(q_h, k_h, (((1,), (1,)), ((), ())),
                            preferred_element_type=jnp.float32)       # (L, 2L)
        s_s, s_b = s[:, :L], s[:, L:]
        p_s = jnp.exp(s_s - jnp.max(s_s, axis=-1, keepdims=True))
        p_b = jnp.exp(s_b - jnp.max(s_b, axis=-1, keepdims=True))
        # Fold both softmax normalizations AND the 0.5/0.5 branch mix into the
        # probability weights -> a single value matmul produces the mixed head.
        w_s = p_s * (0.5 * pl.reciprocal(jnp.sum(p_s, axis=-1, keepdims=True)))
        w_b = p_b * (0.5 * pl.reciprocal(jnp.sum(p_b, axis=-1, keepdims=True)))
        p = jnp.concatenate([w_s, w_b], axis=-1)                       # (L, 2L)
        head_outs.append(jnp.dot(p, v_h, preferred_element_type=jnp.float32))

    mixed = jnp.concatenate(head_outs, axis=-1)                        # (L, E)
    attn = jnp.dot(mixed, w_o_ref[...], preferred_element_type=jnp.float32)
    attn = attn + b_o_ref[...]           # out_proj bias applied exactly once

    def layer_norm(z, g, be):
        mu = jnp.mean(z, axis=-1, keepdims=True)
        var = jnp.mean((z - mu) ** 2, axis=-1, keepdims=True)   # biased, as torch
        return (z - mu) * lax.rsqrt(var + eps) * g + be

    # residual + LN1
    y1 = layer_norm(x + attn, g1_ref[...], be1_ref[...])               # (L, E)

    # feed-forward (relu) + residual + LN2
    h1 = jnp.dot(y1, w1_ref[...], preferred_element_type=jnp.float32) + b1_ref[...]
    h1 = jnp.maximum(h1, 0.0)
    ff = jnp.dot(h1, w2_ref[...], preferred_element_type=jnp.float32) + b2_ref[...]

    o_ref[...] = layer_norm(y1 + ff, g2_ref[...], be2_ref[...]).astype(o_ref.dtype)


# ---------------------------------------------------------------------------
# Wrapper
# ---------------------------------------------------------------------------

def transformer_encoder_layer(src, bert, params, eps=1e-5):
    """src, bert: (L, N, E). Eval-mode forward of the dual-attention layer."""
    L, N, E = src.shape
    H = params["nhead"]
    FF = params["linear1_weight"].shape[0]

    # Parameter layout prep (one-time): matmul operands as (K, N_out).
    w_qkv = params["in_proj_weight"].T                    # (E, 3E)
    b_qkv = params["in_proj_bias"].reshape(1, 3 * E)
    w_o = params["out_proj_weight"].T                     # (E, E)
    b_o = params["out_proj_bias"].reshape(1, E)
    w1 = params["linear1_weight"].T                       # (E, FF)
    b1 = params["linear1_bias"].reshape(1, FF)
    w2 = params["linear2_weight"].T                       # (FF, E)
    b2 = params["linear2_bias"].reshape(1, E)
    g1 = params["norm1_gamma"].reshape(1, E)
    be1 = params["norm1_beta"].reshape(1, E)
    g2 = params["norm2_gamma"].reshape(1, E)
    be2 = params["norm2_beta"].reshape(1, E)

    # Batch-major so each grid step owns a contiguous (L, E) slab (block dims
    # equal the full array dims, satisfying the (8, 128)/full-dim tiling rule).
    src_nle = src.transpose(1, 0, 2)      # (N, L, E)
    bert_nle = bert.transpose(1, 0, 2)

    batch_spec = pl.BlockSpec((None, L, E), lambda n: (n, 0, 0))

    def full(shape):
        return pl.BlockSpec(shape, lambda n: (0, 0))      # weights: constant block

    out = pl.pallas_call(
        functools.partial(_encoder_layer_kernel, nhead=H, eps=eps),
        out_shape=jax.ShapeDtypeStruct((N, L, E), src.dtype),
        grid=(N,),
        in_specs=[
            batch_spec, batch_spec,
            full((E, 3 * E)), full((1, 3 * E)),
            full((E, E)), full((1, E)),
            full((E, FF)), full((1, FF)),
            full((FF, E)), full((1, E)),
            full((1, E)), full((1, E)),
            full((1, E)), full((1, E)),
        ],
        out_specs=batch_spec,
        compiler_params=pltpu.CompilerParams(
            dimension_semantics=("parallel",)),   # 2 TCs on v7x; neutral on v5e/v6e
    )(src_nle, bert_nle, w_qkv, b_qkv, w_o, b_o, w1, b1, w2, b2,
      g1, be1, g2, be2)

    return out.transpose(1, 0, 2)          # back to (L, N, E)


# ---------------------------------------------------------------------------
# Pure-JAX reference (for correctness check)
# ---------------------------------------------------------------------------

def _mha_ref(query, key, value, p):
    L, N, E = query.shape
    H = p["nhead"]
    hd = E // H
    Wq, Wk, Wv = jnp.split(p["in_proj_weight"], 3, axis=0)
    bq, bk, bv = jnp.split(p["in_proj_bias"], 3)
    q = query.reshape(L * N, E) @ Wq.T + bq
    k = key.reshape(L * N, E) @ Wk.T + bk
    v = value.reshape(L * N, E) @ Wv.T + bv
    q = (q / math.sqrt(hd)).reshape(L, N * H, hd).transpose(1, 0, 2)
    k = k.reshape(L, N * H, hd).transpose(1, 0, 2)
    v = v.reshape(L, N * H, hd).transpose(1, 0, 2)
    s = jnp.einsum("bld,bmd->blm", q, k)
    pm = jax.nn.softmax(s, axis=-1)
    o = jnp.einsum("blm,bmd->bld", pm, v)
    o = o.transpose(1, 0, 2).reshape(L * N, E)
    o = o @ p["out_proj_weight"].T + p["out_proj_bias"]
    return o.reshape(L, N, E)


def _ln_ref(z, g, b, eps=1e-5):
    mean = jnp.mean(z, axis=-1, keepdims=True)
    var = jnp.mean((z - mean) ** 2, axis=-1, keepdims=True)
    return (z - mean) / jnp.sqrt(var + eps) * g + b


def _layer_ref(src, bert, p):
    src_s = _mha_ref(src, src, src, p)
    src_b = _mha_ref(src, bert, bert, p)
    x = _ln_ref(src + 0.5 * src_s + 0.5 * src_b, p["norm1_gamma"], p["norm1_beta"])
    h = jnp.maximum(x @ p["linear1_weight"].T + p["linear1_bias"], 0.0)
    ff = h @ p["linear2_weight"].T + p["linear2_bias"]
    return _ln_ref(x + ff, p["norm2_gamma"], p["norm2_beta"])


# ---------------------------------------------------------------------------
# Main
# ---------------------------------------------------------------------------

if __name__ == "__main__":
    L, N, E, H, FF = 8, 2, 32, 4, 64   # seq, batch, d_model, nhead, dim_feedforward

    key = jax.random.PRNGKey(0)
    ks = jax.random.split(key, 10)
    f32 = jnp.float32

    params = {
        "nhead": H,
        "in_proj_weight": 0.1 * jax.random.normal(ks[0], (3 * E, E), f32),
        "in_proj_bias": 0.1 * jax.random.normal(ks[1], (3 * E,), f32),
        "out_proj_weight": 0.1 * jax.random.normal(ks[2], (E, E), f32),
        "out_proj_bias": 0.1 * jax.random.normal(ks[3], (E,), f32),
        "linear1_weight": 0.1 * jax.random.normal(ks[4], (FF, E), f32),
        "linear1_bias": 0.1 * jax.random.normal(ks[5], (FF,), f32),
        "linear2_weight": 0.1 * jax.random.normal(ks[6], (E, FF), f32),
        "linear2_bias": 0.1 * jax.random.normal(ks[7], (E,), f32),
        "norm1_gamma": jnp.ones((E,), f32),
        "norm1_beta": jnp.zeros((E,), f32),
        "norm2_gamma": jnp.ones((E,), f32),
        "norm2_beta": jnp.zeros((E,), f32),
    }

    src = jax.random.normal(ks[8], (L, N, E), f32)
    bert = jax.random.normal(ks[9], (L, N, E), f32)

    out = transformer_encoder_layer(src, bert, params)
    out = jax.block_until_ready(out)

    # Reference at full f32 matmul precision; small headroom covers MXU f32
    # multi-pass rounding differences (observed error ~1e-6).
    with jax.default_matmul_precision("highest"):
        ref = _layer_ref(src, bert, params)
    ref = jax.block_until_ready(ref)

    assert out.shape == (L, N, E), out.shape
    err = float(jnp.max(jnp.abs(out - ref)))
    assert err < 2e-3, err

    print("KERNEL_OK")
</pallas_src>

<mosaic_0001>
module attributes {stable_mosaic.version = 11 : i64} {
  func.func @_encoder_layer_kernel(%arg0: i32, %arg1: memref<1x8x32xf32, #tpu.memory_space<vmem>>, %arg2: memref<1x8x32xf32, #tpu.memory_space<vmem>>, %arg3: memref<32x96xf32, #tpu.memory_space<vmem>>, %arg4: memref<1x96xf32, #tpu.memory_space<vmem>>, %arg5: memref<32x32xf32, #tpu.memory_space<vmem>>, %arg6: memref<1x32xf32, #tpu.memory_space<vmem>>, %arg7: memref<32x64xf32, #tpu.memory_space<vmem>>, %arg8: memref<1x64xf32, #tpu.memory_space<vmem>>, %arg9: memref<64x32xf32, #tpu.memory_space<vmem>>, %arg10: memref<1x32xf32, #tpu.memory_space<vmem>>, %arg11: memref<1x32xf32, #tpu.memory_space<vmem>>, %arg12: memref<1x32xf32, #tpu.memory_space<vmem>>, %arg13: memref<1x32xf32, #tpu.memory_space<vmem>>, %arg14: memref<1x32xf32, #tpu.memory_space<vmem>>, %arg15: memref<1x8x32xf32, #tpu.memory_space<vmem>>) attributes {dimension_semantics = [#tpu.dimension_semantics<parallel>], iteration_bounds = array<i64: 2>, scalar_prefetch = 0 : i64, scratch_operands = 0 : i64, tpu.core_type = #tpu.core_type<tc>, window_params = [{transform_indices = @transform_0, window_bounds = array<i64: 1, 8, 32>}, {transform_indices = @transform_1, window_bounds = array<i64: 1, 8, 32>}, {pipeline_mode = #tpu.pipeline_mode<synchronous>, transform_indices = @transform_2, window_bounds = array<i64: 32, 96>}, {pipeline_mode = #tpu.pipeline_mode<synchronous>, transform_indices = @transform_3, window_bounds = array<i64: 1, 96>}, {pipeline_mode = #tpu.pipeline_mode<synchronous>, transform_indices = @transform_4, window_bounds = array<i64: 32, 32>}, {pipeline_mode = #tpu.pipeline_mode<synchronous>, transform_indices = @transform_5, window_bounds = array<i64: 1, 32>}, {pipeline_mode = #tpu.pipeline_mode<synchronous>, transform_indices = @transform_6, window_bounds = array<i64: 32, 64>}, {pipeline_mode = #tpu.pipeline_mode<synchronous>, transform_indices = @transform_7, window_bounds = array<i64: 1, 64>}, {pipeline_mode = #tpu.pipeline_mode<synchronous>, transform_indices = @transform_8, window_bounds = array<i64: 64, 32>}, {pipeline_mode = #tpu.pipeline_mode<synchronous>, transform_indices = @transform_9, window_bounds = array<i64: 1, 32>}, {pipeline_mode = #tpu.pipeline_mode<synchronous>, transform_indices = @transform_10, window_bounds = array<i64: 1, 32>}, {pipeline_mode = #tpu.pipeline_mode<synchronous>, transform_indices = @transform_11, window_bounds = array<i64: 1, 32>}, {pipeline_mode = #tpu.pipeline_mode<synchronous>, transform_indices = @transform_12, window_bounds = array<i64: 1, 32>}, {pipeline_mode = #tpu.pipeline_mode<synchronous>, transform_indices = @transform_13, window_bounds = array<i64: 1, 32>}, {transform_indices = @transform_14, window_bounds = array<i64: 1, 8, 32>}]} {
    %c0 = arith.constant 0 : index
    %c0_0 = arith.constant 0 : index
    %c0_1 = arith.constant 0 : index
    %0 = vector.load %arg1[%c0, %c0_0, %c0_1] : memref<1x8x32xf32, #tpu.memory_space<vmem>>, vector<1x8x32xf32>
    %1 = vector.shape_cast %0 : vector<1x8x32xf32> to vector<8x32xf32>
    %c0_2 = arith.constant 0 : index
    %c0_3 = arith.constant 0 : index
    %c0_4 = arith.constant 0 : index
    %2 = vector.load %arg2[%c0_2, %c0_3, %c0_4] : memref<1x8x32xf32, #tpu.memory_space<vmem>>, vector<1x8x32xf32>
    %3 = vector.shape_cast %2 : vector<1x8x32xf32> to vector<8x32xf32>
    %4 = tpu.concatenate %1, %3 in 0 : vector<8x32xf32>, vector<8x32xf32> -> vector<16x32xf32>
    %c0_5 = arith.constant 0 : index
    %c0_6 = arith.constant 0 : index
    %5 = vector.load %arg3[%c0_5, %c0_6] : memref<32x96xf32, #tpu.memory_space<vmem>>, vector<32x96xf32>
    %cst = arith.constant dense<0.000000e+00> : vector<16x96xf32>
    %6 = tpu.matmul %4, %5, %cst {dimension_numbers = #tpu.dot_dimension_numbers<[1], [0], [0], [1], [0, 0, 1, 1], [], []>} : vector<16x32xf32>, vector<32x96xf32>, vector<16x96xf32> -> vector<16x96xf32>
    %c0_7 = arith.constant 0 : index
    %c0_8 = arith.constant 0 : index
    %7 = vector.load %arg4[%c0_7, %c0_8] : memref<1x96xf32, #tpu.memory_space<vmem>>, vector<1x96xf32>
    %8 = vector.broadcast %7 : vector<1x96xf32> to vector<16x96xf32>
    %9 = arith.addf %6, %8 : vector<16x96xf32>
    %10 = vector.extract_strided_slice %9 {offsets = [0, 0], sizes = [8, 32], strides = [1, 1]} : vector<16x96xf32> to vector<8x32xf32>
    %cst_9 = arith.constant 0.353553385 : f32
    %11 = vector.broadcast %cst_9 : f32 to vector<8x32xf32>
    %12 = arith.mulf %10, %11 : vector<8x32xf32>
    %13 = vector.extract_strided_slice %9 {offsets = [0, 32], sizes = [16, 32], strides = [1, 1]} : vector<16x96xf32> to vector<16x32xf32>
    %14 = vector.extract_strided_slice %9 {offsets = [0, 64], sizes = [16, 32], strides = [1, 1]} : vector<16x96xf32> to vector<16x32xf32>
    %15 = vector.extract_strided_slice %12 {offsets = [0, 0], sizes = [8, 8], strides = [1, 1]} : vector<8x32xf32> to vector<8x8xf32>
    %16 = vector.extract_strided_slice %13 {offsets = [0, 0], sizes = [16, 8], strides = [1, 1]} : vector<16x32xf32> to vector<16x8xf32>
    %17 = vector.extract_strided_slice %14 {offsets = [0, 0], sizes = [16, 8], strides = [1, 1]} : vector<16x32xf32> to vector<16x8xf32>
    %cst_10 = arith.constant dense<0.000000e+00> : vector<8x16xf32>
    %18 = tpu.matmul %15, %16, %cst_10 {dimension_numbers = #tpu.dot_dimension_numbers<[1], [1], [0], [0], [0, 0, 1, 0], [], []>} : vector<8x8xf32>, vector<16x8xf32>, vector<8x16xf32> -> vector<8x16xf32>
    %19 = vector.extract_strided_slice %18 {offsets = [0, 0], sizes = [8, 8], strides = [1, 1]} : vector<8x16xf32> to vector<8x8xf32>
    %20 = vector.extract_strided_slice %18 {offsets = [0, 8], sizes = [8, 8], strides = [1, 1]} : vector<8x16xf32> to vector<8x8xf32>
    %cst_11 = arith.constant dense<0xFF800000> : vector<8xf32>
    %21 = vector.multi_reduction <maximumf>, %19, %cst_11 [1] : vector<8x8xf32> to vector<8xf32>
    %22 = vector.shape_cast %21 : vector<8xf32> to vector<8x1xf32>
    %23 = vector.broadcast %22 : vector<8x1xf32> to vector<8x8xf32>
    %24 = arith.subf %19, %23 : vector<8x8xf32>
    %25 = math.exp %24 : vector<8x8xf32>
    %cst_12 = arith.constant dense<0xFF800000> : vector<8xf32>
    %26 = vector.multi_reduction <maximumf>, %20, %cst_12 [1] : vector<8x8xf32> to vector<8xf32>
    %27 = vector.shape_cast %26 : vector<8xf32> to vector<8x1xf32>
    %28 = vector.broadcast %27 : vector<8x1xf32> to vector<8x8xf32>
    %29 = arith.subf %20, %28 : vector<8x8xf32>
    %30 = math.exp %29 : vector<8x8xf32>
    %cst_13 = arith.constant dense<0.000000e+00> : vector<8xf32>
    %31 = vector.multi_reduction <add>, %25, %cst_13 [1] : vector<8x8xf32> to vector<8xf32>
    %32 = vector.shape_cast %31 : vector<8xf32> to vector<8x1xf32>
    %33 = tpu.reciprocal %32 : vector<8x1xf32> -> vector<8x1xf32>
    %cst_14 = arith.constant 5.000000e-01 : f32
    %34 = vector.broadcast %cst_14 : f32 to vector<8x1xf32>
    %35 = arith.mulf %34, %33 : vector<8x1xf32>
    %36 = vector.broadcast %35 : vector<8x1xf32> to vector<8x8xf32>
    %37 = arith.mulf %25, %36 : vector<8x8xf32>
    %cst_15 = arith.constant dense<0.000000e+00> : vector<8xf32>
    %38 = vector.multi_reduction <add>, %30, %cst_15 [1] : vector<8x8xf32> to vector<8xf32>
    %39 = vector.shape_cast %38 : vector<8xf32> to vector<8x1xf32>
    %40 = tpu.reciprocal %39 : vector<8x1xf32> -> vector<8x1xf32>
    %cst_16 = arith.constant 5.000000e-01 : f32
    %41 = vector.broadcast %cst_16 : f32 to vector<8x1xf32>
    %42 = arith.mulf %41, %40 : vector<8x1xf32>
    %43 = vector.broadcast %42 : vector<8x1xf32> to vector<8x8xf32>
    %44 = arith.mulf %30, %43 : vector<8x8xf32>
    %45 = tpu.concatenate %37, %44 in 1 : vector<8x8xf32>, vector<8x8xf32> -> vector<8x16xf32>
    %cst_17 = arith.constant dense<0.000000e+00> : vector<8x8xf32>
    %46 = tpu.matmul %45, %17, %cst_17 {dimension_numbers = #tpu.dot_dimension_numbers<[1], [0], [0], [1], [0, 0, 1, 1], [], []>} : vector<8x16xf32>, vector<16x8xf32>, vector<8x8xf32> -> vector<8x8xf32>
    %47 = vector.extract_strided_slice %12 {offsets = [0, 8], sizes = [8, 8], strides = [1, 1]} : vector<8x32xf32> to vector<8x8xf32>
    %48 = vector.extract_strided_slice %13 {offsets = [0, 8], sizes = [16, 8], strides = [1, 1]} : vector<16x32xf32> to vector<16x8xf32>
    %49 = vector.extract_strided_slice %14 {offsets = [0, 8], sizes = [16, 8], strides = [1, 1]} : vector<16x32xf32> to vector<16x8xf32>
    %cst_18 = arith.constant dense<0.000000e+00> : vector<8x16xf32>
    %50 = tpu.matmul %47, %48, %cst_18 {dimension_numbers = #tpu.dot_dimension_numbers<[1], [1], [0], [0], [0, 0, 1, 0], [], []>} : vector<8x8xf32>, vector<16x8xf32>, vector<8x16xf32> -> vector<8x16xf32>
    %51 = vector.extract_strided_slice %50 {offsets = [0, 0], sizes = [8, 8], strides = [1, 1]} : vector<8x16xf32> to vector<8x8xf32>
    %52 = vector.extract_strided_slice %50 {offsets = [0, 8], sizes = [8, 8], strides = [1, 1]} : vector<8x16xf32> to vector<8x8xf32>
    %cst_19 = arith.constant dense<0xFF800000> : vector<8xf32>
    %53 = vector.multi_reduction <maximumf>, %51, %cst_19 [1] : vector<8x8xf32> to vector<8xf32>
    %54 = vector.shape_cast %53 : vector<8xf32> to vector<8x1xf32>
    %55 = vector.broadcast %54 : vector<8x1xf32> to vector<8x8xf32>
    %56 = arith.subf %51, %55 : vector<8x8xf32>
    %57 = math.exp %56 : vector<8x8xf32>
    %cst_20 = arith.constant dense<0xFF800000> : vector<8xf32>
    %58 = vector.multi_reduction <maximumf>, %52, %cst_20 [1] : vector<8x8xf32> to vector<8xf32>
    %59 = vector.shape_cast %58 : vector<8xf32> to vector<8x1xf32>
    %60 = vector.broadcast %59 : vector<8x1xf32> to vector<8x8xf32>
    %61 = arith.subf %52, %60 : vector<8x8xf32>
    %62 = math.exp %61 : vector<8x8xf32>
    %cst_21 = arith.constant dense<0.000000e+00> : vector<8xf32>
    %63 = vector.multi_reduction <add>, %57, %cst_21 [1] : vector<8x8xf32> to vector<8xf32>
    %64 = vector.shape_cast %63 : vector<8xf32> to vector<8x1xf32>
    %65 = tpu.reciprocal %64 : vector<8x1xf32> -> vector<8x1xf32>
    %cst_22 = arith.constant 5.000000e-01 : f32
    %66 = vector.broadcast %cst_22 : f32 to vector<8x1xf32>
    %67 = arith.mulf %66, %65 : vector<8x1xf32>
    %68 = vector.broadcast %67 : vector<8x1xf32> to vector<8x8xf32>
    %69 = arith.mulf %57, %68 : vector<8x8xf32>
    %cst_23 = arith.constant dense<0.000000e+00> : vector<8xf32>
    %70 = vector.multi_reduction <add>, %62, %cst_23 [1] : vector<8x8xf32> to vector<8xf32>
    %71 = vector.shape_cast %70 : vector<8xf32> to vector<8x1xf32>
    %72 = tpu.reciprocal %71 : vector<8x1xf32> -> vector<8x1xf32>
    %cst_24 = arith.constant 5.000000e-01 : f32
    %73 = vector.broadcast %cst_24 : f32 to vector<8x1xf32>
    %74 = arith.mulf %73, %72 : vector<8x1xf32>
    %75 = vector.broadcast %74 : vector<8x1xf32> to vector<8x8xf32>
    %76 = arith.mulf %62, %75 : vector<8x8xf32>
    %77 = tpu.concatenate %69, %76 in 1 : vector<8x8xf32>, vector<8x8xf32> -> vector<8x16xf32>
    %cst_25 = arith.constant dense<0.000000e+00> : vector<8x8xf32>
    %78 = tpu.matmul %77, %49, %cst_25 {dimension_numbers = #tpu.dot_dimension_numbers<[1], [0], [0], [1], [0, 0, 1, 1], [], []>} : vector<8x16xf32>, vector<16x8xf32>, vector<8x8xf32> -> vector<8x8xf32>
    %79 = vector.extract_strided_slice %12 {offsets = [0, 16], sizes = [8, 8], strides = [1, 1]} : vector<8x32xf32> to vector<8x8xf32>
    %80 = vector.extract_strided_slice %13 {offsets = [0, 16], sizes = [16, 8], strides = [1, 1]} : vector<16x32xf32> to vector<16x8xf32>
    %81 = vector.extract_strided_slice %14 {offsets = [0, 16], sizes = [16, 8], strides = [1, 1]} : vector<16x32xf32> to vector<16x8xf32>
    %cst_26 = arith.constant dense<0.000000e+00> : vector<8x16xf32>
    %82 = tpu.matmul %79, %80, %cst_26 {dimension_numbers = #tpu.dot_dimension_numbers<[1], [1], [0], [0], [0, 0, 1, 0], [], []>} : vector<8x8xf32>, vector<16x8xf32>, vector<8x16xf32> -> vector<8x16xf32>
    %83 = vector.extract_strided_slice %82 {offsets = [0, 0], sizes = [8, 8], strides = [1, 1]} : vector<8x16xf32> to vector<8x8xf32>
    %84 = vector.extract_strided_slice %82 {offsets = [0, 8], sizes = [8, 8], strides = [1, 1]} : vector<8x16xf32> to vector<8x8xf32>
    %cst_27 = arith.constant dense<0xFF800000> : vector<8xf32>
    %85 = vector.multi_reduction <maximumf>, %83, %cst_27 [1] : vector<8x8xf32> to vector<8xf32>
    %86 = vector.shape_cast %85 : vector<8xf32> to vector<8x1xf32>
    %87 = vector.broadcast %86 : vector<8x1xf32> to vector<8x8xf32>
    %88 = arith.subf %83, %87 : vector<8x8xf32>
    %89 = math.exp %88 : vector<8x8xf32>
    %cst_28 = arith.constant dense<0xFF800000> : vector<8xf32>
    %90 = vector.multi_reduction <maximumf>, %84, %cst_28 [1] : vector<8x8xf32> to vector<8xf32>
    %91 = vector.shape_cast %90 : vector<8xf32> to vector<8x1xf32>
    %92 = vector.broadcast %91 : vector<8x1xf32> to vector<8x8xf32>
    %93 = arith.subf %84, %92 : vector<8x8xf32>
    %94 = math.exp %93 : vector<8x8xf32>
    %cst_29 = arith.constant dense<0.000000e+00> : vector<8xf32>
    %95 = vector.multi_reduction <add>, %89, %cst_29 [1] : vector<8x8xf32> to vector<8xf32>
    %96 = vector.shape_cast %95 : vector<8xf32> to vector<8x1xf32>
    %97 = tpu.reciprocal %96 : vector<8x1xf32> -> vector<8x1xf32>
    %cst_30 = arith.constant 5.000000e-01 : f32
    %98 = vector.broadcast %cst_30 : f32 to vector<8x1xf32>
    %99 = arith.mulf %98, %97 : vector<8x1xf32>
    %100 = vector.broadcast %99 : vector<8x1xf32> to vector<8x8xf32>
    %101 = arith.mulf %89, %100 : vector<8x8xf32>
    %cst_31 = arith.constant dense<0.000000e+00> : vector<8xf32>
    %102 = vector.multi_reduction <add>, %94, %cst_31 [1] : vector<8x8xf32> to vector<8xf32>
    %103 = vector.shape_cast %102 : vector<8xf32> to vector<8x1xf32>
    %104 = tpu.reciprocal %103 : vector<8x1xf32> -> vector<8x1xf32>
    %cst_32 = arith.constant 5.000000e-01 : f32
    %105 = vector.broadcast %cst_32 : f32 to vector<8x1xf32>
    %106 = arith.mulf %105, %104 : vector<8x1xf32>
    %107 = vector.broadcast %106 : vector<8x1xf32> to vector<8x8xf32>
    %108 = arith.mulf %94, %107 : vector<8x8xf32>
    %109 = tpu.concatenate %101, %108 in 1 : vector<8x8xf32>, vector<8x8xf32> -> vector<8x16xf32>
    %cst_33 = arith.constant dense<0.000000e+00> : vector<8x8xf32>
    %110 = tpu.matmul %109, %81, %cst_33 {dimension_numbers = #tpu.dot_dimension_numbers<[1], [0], [0], [1], [0, 0, 1, 1], [], []>} : vector<8x16xf32>, vector<16x8xf32>, vector<8x8xf32> -> vector<8x8xf32>
    %111 = vector.extract_strided_slice %12 {offsets = [0, 24], sizes = [8, 8], strides = [1, 1]} : vector<8x32xf32> to vector<8x8xf32>
    %112 = vector.extract_strided_slice %13 {offsets = [0, 24], sizes = [16, 8], strides = [1, 1]} : vector<16x32xf32> to vector<16x8xf32>
    %113 = vector.extract_strided_slice %14 {offsets = [0, 24], sizes = [16, 8], strides = [1, 1]} : vector<16x32xf32> to vector<16x8xf32>
    %cst_34 = arith.constant dense<0.000000e+00> : vector<8x16xf32>
    %114 = tpu.matmul %111, %112, %cst_34 {dimension_numbers = #tpu.dot_dimension_numbers<[1], [1], [0], [0], [0, 0, 1, 0], [], []>} : vector<8x8xf32>, vector<16x8xf32>, vector<8x16xf32> -> vector<8x16xf32>
    %115 = vector.extract_strided_slice %114 {offsets = [0, 0], sizes = [8, 8], strides = [1, 1]} : vector<8x16xf32> to vector<8x8xf32>
    %116 = vector.extract_strided_slice %114 {offsets = [0, 8], sizes = [8, 8], strides = [1, 1]} : vector<8x16xf32> to vector<8x8xf32>
    %cst_35 = arith.constant dense<0xFF800000> : vector<8xf32>
    %117 = vector.multi_reduction <maximumf>, %115, %cst_35 [1] : vector<8x8xf32> to vector<8xf32>
    %118 = vector.shape_cast %117 : vector<8xf32> to vector<8x1xf32>
    %119 = vector.broadcast %118 : vector<8x1xf32> to vector<8x8xf32>
    %120 = arith.subf %115, %119 : vector<8x8xf32>
    %121 = math.exp %120 : vector<8x8xf32>
    %cst_36 = arith.constant dense<0xFF800000> : vector<8xf32>
    %122 = vector.multi_reduction <maximumf>, %116, %cst_36 [1] : vector<8x8xf32> to vector<8xf32>
    %123 = vector.shape_cast %122 : vector<8xf32> to vector<8x1xf32>
    %124 = vector.broadcast %123 : vector<8x1xf32> to vector<8x8xf32>
    %125 = arith.subf %116, %124 : vector<8x8xf32>
    %126 = math.exp %125 : vector<8x8xf32>
    %cst_37 = arith.constant dense<0.000000e+00> : vector<8xf32>
    %127 = vector.multi_reduction <add>, %121, %cst_37 [1] : vector<8x8xf32> to vector<8xf32>
    %128 = vector.shape_cast %127 : vector<8xf32> to vector<8x1xf32>
    %129 = tpu.reciprocal %128 : vector<8x1xf32> -> vector<8x1xf32>
    %cst_38 = arith.constant 5.000000e-01 : f32
    %130 = vector.broadcast %cst_38 : f32 to vector<8x1xf32>
    %131 = arith.mulf %130, %129 : vector<8x1xf32>
    %132 = vector.broadcast %131 : vector<8x1xf32> to vector<8x8xf32>
    %133 = arith.mulf %121, %132 : vector<8x8xf32>
    %cst_39 = arith.constant dense<0.000000e+00> : vector<8xf32>
    %134 = vector.multi_reduction <add>, %126, %cst_39 [1] : vector<8x8xf32> to vector<8xf32>
    %135 = vector.shape_cast %134 : vector<8xf32> to vector<8x1xf32>
    %136 = tpu.reciprocal %135 : vector<8x1xf32> -> vector<8x1xf32>
    %cst_40 = arith.constant 5.000000e-01 : f32
    %137 = vector.broadcast %cst_40 : f32 to vector<8x1xf32>
    %138 = arith.mulf %137, %136 : vector<8x1xf32>
    %139 = vector.broadcast %138 : vector<8x1xf32> to vector<8x8xf32>
    %140 = arith.mulf %126, %139 : vector<8x8xf32>
    %141 = tpu.concatenate %133, %140 in 1 : vector<8x8xf32>, vector<8x8xf32> -> vector<8x16xf32>
    %cst_41 = arith.constant dense<0.000000e+00> : vector<8x8xf32>
    %142 = tpu.matmul %141, %113, %cst_41 {dimension_numbers = #tpu.dot_dimension_numbers<[1], [0], [0], [1], [0, 0, 1, 1], [], []>} : vector<8x16xf32>, vector<16x8xf32>, vector<8x8xf32> -> vector<8x8xf32>
    %143 = tpu.concatenate %46, %78, %110, %142 in 1 : vector<8x8xf32>, vector<8x8xf32>, vector<8x8xf32>, vector<8x8xf32> -> vector<8x32xf32>
    %c0_42 = arith.constant 0 : index
    %c0_43 = arith.constant 0 : index
    %144 = vector.load %arg5[%c0_42, %c0_43] : memref<32x32xf32, #tpu.memory_space<vmem>>, vector<32x32xf32>
    %cst_44 = arith.constant dense<0.000000e+00> : vector<8x32xf32>
    %145 = tpu.matmul %143, %144, %cst_44 {dimension_numbers = #tpu.dot_dimension_numbers<[1], [0], [0], [1], [0, 0, 1, 1], [], []>} : vector<8x32xf32>, vector<32x32xf32>, vector<8x32xf32> -> vector<8x32xf32>
    %c0_45 = arith.constant 0 : index
    %c0_46 = arith.constant 0 : index
    %146 = vector.load %arg6[%c0_45, %c0_46] : memref<1x32xf32, #tpu.memory_space<vmem>>, vector<1x32xf32>
    %147 = vector.broadcast %146 : vector<1x32xf32> to vector<8x32xf32>
    %148 = arith.addf %145, %147 : vector<8x32xf32>
    %149 = arith.addf %1, %148 : vector<8x32xf32>
    %c0_47 = arith.constant 0 : index
    %c0_48 = arith.constant 0 : index
    %150 = vector.load %arg11[%c0_47, %c0_48] : memref<1x32xf32, #tpu.memory_space<vmem>>, vector<1x32xf32>
    %c0_49 = arith.constant 0 : index
    %c0_50 = arith.constant 0 : index
    %151 = vector.load %arg12[%c0_49, %c0_50] : memref<1x32xf32, #tpu.memory_space<vmem>>, vector<1x32xf32>
    %cst_51 = arith.constant dense<0.000000e+00> : vector<8xf32>
    %152 = vector.multi_reduction <add>, %149, %cst_51 [1] : vector<8x32xf32> to vector<8xf32>
    %153 = vector.shape_cast %152 : vector<8xf32> to vector<8x1xf32>
    %cst_52 = arith.constant 3.200000e+01 : f32
    %154 = vector.broadcast %cst_52 : f32 to vector<8x1xf32>
    %155 = arith.divf %153, %154 : vector<8x1xf32>
    %156 = vector.broadcast %155 : vector<8x1xf32> to vector<8x32xf32>
    %157 = arith.subf %149, %156 : vector<8x32xf32>
    %158 = arith.mulf %157, %157 : vector<8x32xf32>
    %cst_53 = arith.constant dense<0.000000e+00> : vector<8xf32>
    %159 = vector.multi_reduction <add>, %158, %cst_53 [1] : vector<8x32xf32> to vector<8xf32>
    %160 = vector.shape_cast %159 : vector<8xf32> to vector<8x1xf32>
    %cst_54 = arith.constant 3.200000e+01 : f32
    %161 = vector.broadcast %cst_54 : f32 to vector<8x1xf32>
    %162 = arith.divf %160, %161 : vector<8x1xf32>
    %163 = vector.broadcast %155 : vector<8x1xf32> to vector<8x32xf32>
    %164 = arith.subf %149, %163 : vector<8x32xf32>
    %cst_55 = arith.constant 9.99999974E-6 : f32
    %165 = vector.broadcast %cst_55 : f32 to vector<8x1xf32>
    %166 = arith.addf %162, %165 : vector<8x1xf32>
    %167 = math.rsqrt %166 : vector<8x1xf32>
    %168 = vector.broadcast %167 : vector<8x1xf32> to vector<8x32xf32>
    %169 = arith.mulf %164, %168 : vector<8x32xf32>
    %170 = vector.broadcast %150 : vector<1x32xf32> to vector<8x32xf32>
    %171 = arith.mulf %169, %170 : vector<8x32xf32>
    %172 = vector.broadcast %151 : vector<1x32xf32> to vector<8x32xf32>
    %173 = arith.addf %171, %172 : vector<8x32xf32>
    %c0_56 = arith.constant 0 : index
    %c0_57 = arith.constant 0 : index
    %174 = vector.load %arg7[%c0_56, %c0_57] : memref<32x64xf32, #tpu.memory_space<vmem>>, vector<32x64xf32>
    %cst_58 = arith.constant dense<0.000000e+00> : vector<8x64xf32>
    %175 = tpu.matmul %173, %174, %cst_58 {dimension_numbers = #tpu.dot_dimension_numbers<[1], [0], [0], [1], [0, 0, 1, 1], [], []>} : vector<8x32xf32>, vector<32x64xf32>, vector<8x64xf32> -> vector<8x64xf32>
    %c0_59 = arith.constant 0 : index
    %c0_60 = arith.constant 0 : index
    %176 = vector.load %arg8[%c0_59, %c0_60] : memref<1x64xf32, #tpu.memory_space<vmem>>, vector<1x64xf32>
    %177 = vector.broadcast %176 : vector<1x64xf32> to vector<8x64xf32>
    %178 = arith.addf %175, %177 : vector<8x64xf32>
    %cst_61 = arith.constant 0.000000e+00 : f32
    %179 = vector.broadcast %cst_61 : f32 to vector<8x64xf32>
    %180 = arith.maximumf %178, %179 : vector<8x64xf32>
    %c0_62 = arith.constant 0 : index
    %c0_63 = arith.constant 0 : index
    %181 = vector.load %arg9[%c0_62, %c0_63] : memref<64x32xf32, #tpu.memory_space<vmem>>, vector<64x32xf32>
    %cst_64 = arith.constant dense<0.000000e+00> : vector<8x32xf32>
    %182 = tpu.matmul %180, %181, %cst_64 {dimension_numbers = #tpu.dot_dimension_numbers<[1], [0], [0], [1], [0, 0, 1, 1], [], []>} : vector<8x64xf32>, vector<64x32xf32>, vector<8x32xf32> -> vector<8x32xf32>
    %c0_65 = arith.constant 0 : index
    %c0_66 = arith.constant 0 : index
    %183 = vector.load %arg10[%c0_65, %c0_66] : memref<1x32xf32, #tpu.memory_space<vmem>>, vector<1x32xf32>
    %184 = vector.broadcast %183 : vector<1x32xf32> to vector<8x32xf32>
    %185 = arith.addf %182, %184 : vector<8x32xf32>
    %186 = arith.addf %173, %185 : vector<8x32xf32>
    %c0_67 = arith.constant 0 : index
    %c0_68 = arith.constant 0 : index
    %187 = vector.load %arg13[%c0_67, %c0_68] : memref<1x32xf32, #tpu.memory_space<vmem>>, vector<1x32xf32>
    %c0_69 = arith.constant 0 : index
    %c0_70 = arith.constant 0 : index
    %188 = vector.load %arg14[%c0_69, %c0_70] : memref<1x32xf32, #tpu.memory_space<vmem>>, vector<1x32xf32>
    %cst_71 = arith.constant dense<0.000000e+00> : vector<8xf32>
    %189 = vector.multi_reduction <add>, %186, %cst_71 [1] : vector<8x32xf32> to vector<8xf32>
    %190 = vector.shape_cast %189 : vector<8xf32> to vector<8x1xf32>
    %cst_72 = arith.constant 3.200000e+01 : f32
    %191 = vector.broadcast %cst_72 : f32 to vector<8x1xf32>
    %192 = arith.divf %190, %191 : vector<8x1xf32>
    %193 = vector.broadcast %192 : vector<8x1xf32> to vector<8x32xf32>
    %194 = arith.subf %186, %193 : vector<8x32xf32>
    %195 = arith.mulf %194, %194 : vector<8x32xf32>
    %cst_73 = arith.constant dense<0.000000e+00> : vector<8xf32>
    %196 = vector.multi_reduction <add>, %195, %cst_73 [1] : vector<8x32xf32> to vector<8xf32>
    %197 = vector.shape_cast %196 : vector<8xf32> to vector<8x1xf32>
    %cst_74 = arith.constant 3.200000e+01 : f32
    %198 = vector.broadcast %cst_74 : f32 to vector<8x1xf32>
    %199 = arith.divf %197, %198 : vector<8x1xf32>
    %200 = vector.broadcast %192 : vector<8x1xf32> to vector<8x32xf32>
    %201 = arith.subf %186, %200 : vector<8x32xf32>
    %cst_75 = arith.constant 9.99999974E-6 : f32
    %202 = vector.broadcast %cst_75 : f32 to vector<8x1xf32>
    %203 = arith.addf %199, %202 : vector<8x1xf32>
    %204 = math.rsqrt %203 : vector<8x1xf32>
    %205 = vector.broadcast %204 : vector<8x1xf32> to vector<8x32xf32>
    %206 = arith.mulf %201, %205 : vector<8x32xf32>
    %207 = vector.broadcast %187 : vector<1x32xf32> to vector<8x32xf32>
    %208 = arith.mulf %206, %207 : vector<8x32xf32>
    %209 = vector.broadcast %188 : vector<1x32xf32> to vector<8x32xf32>
    %210 = arith.addf %208, %209 : vector<8x32xf32>
    %c0_76 = arith.constant 0 : index
    %c0_77 = arith.constant 0 : index
    %c0_78 = arith.constant 0 : index
    %211 = vector.load %arg15[%c0_76, %c0_77, %c0_78] : memref<1x8x32xf32, #tpu.memory_space<vmem>>, vector<1x8x32xf32>
    %212 = vector.shape_cast %211 : vector<1x8x32xf32> to vector<8x32xf32>
    %213 = vector.shape_cast %210 : vector<8x32xf32> to vector<1x8x32xf32>
    tpu.vector_store %arg15[%c0_76, %c0_77, %c0_78], %213 {strides = array<i32>} : memref<1x8x32xf32, #tpu.memory_space<vmem>>, vector<1x8x32xf32>,
    return
  }
  func.func @transform_0(%arg0: i32) -> (i32, i32, i32) {
    %c0_i32 = arith.constant 0 : i32
    %c0_i32_0 = arith.constant 0 : i32
    %c0_i32_1 = arith.constant 0 : i32
    return %arg0, %c0_i32, %c0_i32_0 : i32, i32, i32
  }
  func.func @transform_1(%arg0: i32) -> (i32, i32, i32) {
    %c0_i32 = arith.constant 0 : i32
    %c0_i32_0 = arith.constant 0 : i32
    %c0_i32_1 = arith.constant 0 : i32
    return %arg0, %c0_i32, %c0_i32_0 : i32, i32, i32
  }
  func.func @transform_2(%arg0: i32) -> (i32, i32) {
    %c0_i32 = arith.constant 0 : i32
    %c0_i32_0 = arith.constant 0 : i32
    %c0_i32_1 = arith.constant 0 : i32
    return %c0_i32, %c0_i32_0 : i32, i32
  }
  func.func @transform_3(%arg0: i32) -> (i32, i32) {
    %c0_i32 = arith.constant 0 : i32
    %c0_i32_0 = arith.constant 0 : i32
    %c0_i32_1 = arith.constant 0 : i32
    return %c0_i32, %c0_i32_0 : i32, i32
  }
  func.func @transform_4(%arg0: i32) -> (i32, i32) {
    %c0_i32 = arith.constant 0 : i32
    %c0_i32_0 = arith.constant 0 : i32
    %c0_i32_1 = arith.constant 0 : i32
    return %c0_i32, %c0_i32_0 : i32, i32
  }
  func.func @transform_5(%arg0: i32) -> (i32, i32) {
    %c0_i32 = arith.constant 0 : i32
    %c0_i32_0 = arith.constant 0 : i32
    %c0_i32_1 = arith.constant 0 : i32
    return %c0_i32, %c0_i32_0 : i32, i32
  }
  func.func @transform_6(%arg0: i32) -> (i32, i32) {
    %c0_i32 = arith.constant 0 : i32
    %c0_i32_0 = arith.constant 0 : i32
    %c0_i32_1 = arith.constant 0 : i32
    return %c0_i32, %c0_i32_0 : i32, i32
  }
  func.func @transform_7(%arg0: i32) -> (i32, i32) {
    %c0_i32 = arith.constant 0 : i32
    %c0_i32_0 = arith.constant 0 : i32
    %c0_i32_1 = arith.constant 0 : i32
    return %c0_i32, %c0_i32_0 : i32, i32
  }
  func.func @transform_8(%arg0: i32) -> (i32, i32) {
    %c0_i32 = arith.constant 0 : i32
    %c0_i32_0 = arith.constant 0 : i32
    %c0_i32_1 = arith.constant 0 : i32
    return %c0_i32, %c0_i32_0 : i32, i32
  }
  func.func @transform_9(%arg0: i32) -> (i32, i32) {
    %c0_i32 = arith.constant 0 : i32
    %c0_i32_0 = arith.constant 0 : i32
    %c0_i32_1 = arith.constant 0 : i32
    return %c0_i32, %c0_i32_0 : i32, i32
  }
  func.func @transform_10(%arg0: i32) -> (i32, i32) {
    %c0_i32 = arith.constant 0 : i32
    %c0_i32_0 = arith.constant 0 : i32
    %c0_i32_1 = arith.constant 0 : i32
    return %c0_i32, %c0_i32_0 : i32, i32
  }
  func.func @transform_11(%arg0: i32) -> (i32, i32) {
    %c0_i32 = arith.constant 0 : i32
    %c0_i32_0 = arith.constant 0 : i32
    %c0_i32_1 = arith.constant 0 : i32
    return %c0_i32, %c0_i32_0 : i32, i32
  }
  func.func @transform_12(%arg0: i32) -> (i32, i32) {
    %c0_i32 = arith.constant 0 : i32
    %c0_i32_0 = arith.constant 0 : i32
    %c0_i32_1 = arith.constant 0 : i32
    return %c0_i32, %c0_i32_0 : i32, i32
  }
  func.func @transform_13(%arg0: i32) -> (i32, i32) {
    %c0_i32 = arith.constant 0 : i32
    %c0_i32_0 = arith.constant 0 : i32
    %c0_i32_1 = arith.constant 0 : i32
    return %c0_i32, %c0_i32_0 : i32, i32
  }
  func.func @transform_14(%arg0: i32) -> (i32, i32, i32) {
    %c0_i32 = arith.constant 0 : i32
    %c0_i32_0 = arith.constant 0 : i32
    %c0_i32_1 = arith.constant 0 : i32
    return %arg0, %c0_i32, %c0_i32_0 : i32, i32, i32
  }
}

</mosaic_0001>

<llo_original>
// kernel: tpu_custom_call.1
$region0: #{tpu_custom_call.1}
  #allocation0 [shape = 'u32[]', space=smem, size = 0x4, offset = 0x4, fixed_abs, tag = 'smem constant byte address 0x4 - core index']
  #allocation1 [shape = 'u32[144,128]{1,0:T(1,128)}', space=vmem, size = 0x12000, scoped, tag = 'internal scratch']
  %s0 = inlined_call_operand.hbm [shape: f32[2,8,32], index: 0, kind: input, shape index: {}]
  %s1 = inlined_call_operand.hbm [shape: f32[2,8,32], index: 1, kind: input, shape index: {}]
  %s2 = inlined_call_operand.vmem [shape: f32[32,96], index: 2, kind: input, shape index: {}]
  %s3 = inlined_call_operand.vmem [shape: f32[1,96], index: 3, kind: input, shape index: {}]
  %s4 = inlined_call_operand.vmem [shape: f32[32,32], index: 4, kind: input, shape index: {}]
  %s5 = inlined_call_operand.vmem [shape: f32[1,32], index: 5, kind: input, shape index: {}]
  %s6 = inlined_call_operand.vmem [shape: f32[32,64], index: 6, kind: input, shape index: {}]
  %s7 = inlined_call_operand.vmem [shape: f32[1,64], index: 7, kind: input, shape index: {}]
  %s8 = inlined_call_operand.vmem [shape: f32[64,32], index: 8, kind: input, shape index: {}]
  %s9 = inlined_call_operand.vmem [shape: f32[1,32], index: 9, kind: input, shape index: {}]
  %s10 = inlined_call_operand.vmem [shape: f32[1,32], index: 10, kind: input, shape index: {}]
  %s11 = inlined_call_operand.vmem [shape: f32[1,32], index: 11, kind: input, shape index: {}]
  %s12 = inlined_call_operand.vmem [shape: f32[1,32], index: 12, kind: input, shape index: {}]
  %s13 = inlined_call_operand.vmem [shape: f32[1,32], index: 13, kind: input, shape index: {}]
  %s14 = inlined_call_operand.hbm [shape: f32[2,8,32], index: 14, kind: output, shape index: {}]
  %s15 = sld [smem:[#allocation0]]
  $region97: #{tpu_custom_call.1} parent=0
    _
  %s17 = ssub.s32 1, %s15
  %s18 = scalar_select 0, %s17, %s15
  $region1: #{tpu_custom_call.1} parent=0
    #allocation2 [shape = 'u8[8192]{0}', space=vmem, size = 0x2000, scoped, tag = 'input window, operand 0']
    #allocation3 [shape = 's32[2]{0}', space=sflag, size = 0x8, scoped, tag = 'scoped memory for tpu_custom_call.1']
    #allocation4 [shape = 's32[2]{0}', space=sflag, size = 0x8, scoped, tag = 'scoped memory for tpu_custom_call.1']
    #allocation5 [shape = 'u8[8192]{0}', space=vmem, size = 0x2000, scoped, tag = 'input window, operand 1']
    #allocation6 [shape = 's32[2]{0}', space=sflag, size = 0x8, scoped, tag = 'scoped memory for tpu_custom_call.1']
    #allocation7 [shape = 'u8[8192]{0}', space=vmem, size = 0x2000, scoped, tag = 'output window, operand 0']
    %19 = vsyncpa [#allocation3], 0
    %s20 = scalar_lea.sflag [#allocation3], 1
    %21 = vsyncpa %s20, 0
    %22 = vsyncpa [#allocation6], 0
    %s23 = scalar_lea.sflag [#allocation6], 1
    %24 = vsyncpa %s23, 0
    %25 = vsyncpa [#allocation4], 0
    %s26 = scalar_lea.sflag [#allocation4], 1
    %27 = vsyncpa %s26, 0
    loop: start=0, step=1, limit=4
    $region2: #{tpu_custom_call.1} parent=1 // loop_pre_header
      _
    $region3: #{tpu_custom_call.1} parent=1 // loop_header
      %s29 = sphi 0, %s33
      %p30 = scmp.ge.s32.totalorder %s29, 4
      %s39 = sphi 0, %s41
      %s42 = sphi 0, %s39
      %s43 = sphi 0, %s42
      %s59 = sphi 0, %s43
      %s65 = sphi 0, %s67
      %s68 = sphi 0, %s65
      %s69 = sphi 0, %s68
      %s85 = sphi 0, %s69
      %s89 = sphi 0, %s89
      %s91 = sphi 0, %s89
      %s92 = sphi 0, %s91
      %s106 = sphi 0, %s92
      %s110 = sphi 0, %s110
      %s112 = sphi 0, %s110
      %s113 = sphi 0, %s112
      %s127 = sphi 0, %s113
      %s131 = sphi 0, %s131
      %s133 = sphi 0, %s131
      %s134 = sphi 0, %s133
      %s148 = sphi 0, %s134
      %s152 = sphi 0, %s152
      %s154 = sphi 0, %s152
      %s155 = sphi 0, %s154
      %s169 = sphi 0, %s155
      %s173 = sphi 0, %s173
      %s175 = sphi 0, %s173
      %s176 = sphi 0, %s175
      %s190 = sphi 0, %s176
      %s194 = sphi 0, %s194
      %s196 = sphi 0, %s194
      %s197 = sphi 0, %s196
      %s211 = sphi 0, %s197
      %s215 = sphi 0, %s215
      %s217 = sphi 0, %s215
      %s218 = sphi 0, %s217
      %s232 = sphi 0, %s218
      %s236 = sphi 0, %s236
      %s238 = sphi 0, %s236
      %s239 = sphi 0, %s238
      %s253 = sphi 0, %s239
      %s257 = sphi 0, %s257
      %s259 = sphi 0, %s257
      %s260 = sphi 0, %s259
      %s274 = sphi 0, %s260
      %s278 = sphi 0, %s278
      %s280 = sphi 0, %s278
      %s281 = sphi 0, %s280
      %s295 = sphi 0, %s281
      %s299 = sphi 0, %s299
      %s301 = sphi 0, %s299
      %s302 = sphi 0, %s301
      %s316 = sphi 0, %s302
      %s320 = sphi 0, %s320
      %s322 = sphi 0, %s320
      %s323 = sphi 0, %s322
      %s337 = sphi 0, %s323
      %s343 = sphi 0, %s345
      %s346 = sphi 0, %s343
      %s347 = sphi 0, %s346
      %s363 = sphi 0, %s347
    $region4: #{tpu_custom_call.1} parent=1 // loop_header_branch
      %32 = sbr.rel (%p30) target = $region8
    $region5: #{tpu_custom_call.1} parent=1 // loop_body
      %s34 = ssub.s32 %s29, 1
      %s35 = ssub.s32 %s29, 2
      %s36 = sadd.s32 %s29, 1
      %s37 = ssub.s32 %s29, %s36
      %p38 = scmp.eq.s32.totalorder %s37, 0
      %s40 = sadd.s32 %s39, 1
      %s41 = scalar_select %p38, %s39, %s40
      %p44 = pneg %p38
      %p45 = scmp.eq.s32.totalorder %s29, 1
      %p46 = por %p44, %p45
      %p47 = scmp.ne.s32.totalorder %s39, %s42
      %p48 = scmp.eq.s32.totalorder %s29, 0
      %p49 = por %p47, %p48
      %p50 = scmp.ne.s32.totalorder %s39, %s42
      %p51 = scmp.eq.s32.totalorder %s34, 1
      %p52 = por %p50, %p51
      %p53 = scmp.ne.s32.totalorder %s42, %s43
      %p54 = scmp.eq.s32.totalorder %s34, 0
      %p55 = por %p53, %p54
      %p56 = scmp.ne.s32.totalorder %s42, %s43
      %p57 = scmp.eq.s32.totalorder %s35, 1
      %p58 = por %p56, %p57
      %p60 = scmp.ne.s32.totalorder %s43, %s59
      %p61 = scmp.eq.s32.totalorder %s35, 0
      %p62 = por %p60, %p61
      %s63 = ssub.s32 %s29, %s36
      %p64 = scmp.eq.s32.totalorder %s63, 0
      %s66 = sadd.s32 %s65, 1
      %s67 = scalar_select %p64, %s65, %s66
      %p70 = pneg %p64
      %p71 = scmp.eq.s32.totalorder %s29, 1
      %p72 = por %p70, %p71
      %p73 = scmp.ne.s32.totalorder %s65, %s68
      %p74 = scmp.eq.s32.totalorder %s29, 0
      %p75 = por %p73, %p74
      %p76 = scmp.ne.s32.totalorder %s65, %s68
      %p77 = scmp.eq.s32.totalorder %s34, 1
      %p78 = por %p76, %p77
      %p79 = scmp.ne.s32.totalorder %s68, %s69
      %p80 = scmp.eq.s32.totalorder %s34, 0
      %p81 = por %p79, %p80
      %p82 = scmp.ne.s32.totalorder %s68, %s69
      %p83 = scmp.eq.s32.totalorder %s35, 1
      %p84 = por %p82, %p83
      %p86 = scmp.ne.s32.totalorder %s69, %s85
      %p87 = scmp.eq.s32.totalorder %s35, 0
      %p88 = por %p86, %p87
      %s90 = sadd.s32 %s89, 1
      %p93 = scmp.eq.s32.totalorder %s29, 1
      %p94 = scmp.ne.s32.totalorder %s89, %s91
      %p95 = scmp.eq.s32.totalorder %s29, 0
      %p96 = por %p94, %p95
      %p97 = scmp.ne.s32.totalorder %s89, %s91
      %p98 = scmp.eq.s32.totalorder %s34, 1
      %p99 = por %p97, %p98
      %p100 = scmp.ne.s32.totalorder %s91, %s92
      %p101 = scmp.eq.s32.totalorder %s34, 0
      %p102 = por %p100, %p101
      %p103 = scmp.ne.s32.totalorder %s91, %s92
      %p104 = scmp.eq.s32.totalorder %s35, 1
      %p105 = por %p103, %p104
      %p107 = scmp.ne.s32.totalorder %s92, %s106
      %p108 = scmp.eq.s32.totalorder %s35, 0
      %p109 = por %p107, %p108
      %s111 = sadd.s32 %s110, 1
      %p114 = scmp.eq.s32.totalorder %s29, 1
      %p115 = scmp.ne.s32.totalorder %s110, %s112
      %p116 = scmp.eq.s32.totalorder %s29, 0
      %p117 = por %p115, %p116
      %p118 = scmp.ne.s32.totalorder %s110, %s112
      %p119 = scmp.eq.s32.totalorder %s34, 1
      %p120 = por %p118, %p119
      %p121 = scmp.ne.s32.totalorder %s112, %s113
      %p122 = scmp.eq.s32.totalorder %s34, 0
      %p123 = por %p121, %p122
      %p124 = scmp.ne.s32.totalorder %s112, %s113
      %p125 = scmp.eq.s32.totalorder %s35, 1
      %p126 = por %p124, %p125
      %p128 = scmp.ne.s32.totalorder %s113, %s127
      %p129 = scmp.eq.s32.totalorder %s35, 0
      %p130 = por %p128, %p129
      %s132 = sadd.s32 %s131, 1
      %p135 = scmp.eq.s32.totalorder %s29, 1
      %p136 = scmp.ne.s32.totalorder %s131, %s133
      %p137 = scmp.eq.s32.totalorder %s29, 0
      %p138 = por %p136, %p137
      %p139 = scmp.ne.s32.totalorder %s131, %s133
      %p140 = scmp.eq.s32.totalorder %s34, 1
      %p141 = por %p139, %p140
      %p142 = scmp.ne.s32.totalorder %s133, %s134
      %p143 = scmp.eq.s32.totalorder %s34, 0
      %p144 = por %p142, %p143
      %p145 = scmp.ne.s32.totalorder %s133, %s134
      %p146 = scmp.eq.s32.totalorder %s35, 1
      %p147 = por %p145, %p146
      %p149 = scmp.ne.s32.totalorder %s134, %s148
      %p150 = scmp.eq.s32.totalorder %s35, 0
      %p151 = por %p149, %p150
      %s153 = sadd.s32 %s152, 1
      %p156 = scmp.eq.s32.totalorder %s29, 1
      %p157 = scmp.ne.s32.totalorder %s152, %s154
      %p158 = scmp.eq.s32.totalorder %s29, 0
      %p159 = por %p157, %p158
      %p160 = scmp.ne.s32.totalorder %s152, %s154
      %p161 = scmp.eq.s32.totalorder %s34, 1
      %p162 = por %p160, %p161
      %p163 = scmp.ne.s32.totalorder %s154, %s155
      %p164 = scmp.eq.s32.totalorder %s34, 0
      %p165 = por %p163, %p164
      %p166 = scmp.ne.s32.totalorder %s154, %s155
      %p167 = scmp.eq.s32.totalorder %s35, 1
      %p168 = por %p166, %p167
      %p170 = scmp.ne.s32.totalorder %s155, %s169
      %p171 = scmp.eq.s32.totalorder %s35, 0
      %p172 = por %p170, %p171
      %s174 = sadd.s32 %s173, 1
      %p177 = scmp.eq.s32.totalorder %s29, 1
      %p178 = scmp.ne.s32.totalorder %s173, %s175
      %p179 = scmp.eq.s32.totalorder %s29, 0
      %p180 = por %p178, %p179
      %p181 = scmp.ne.s32.totalorder %s173, %s175
      %p182 = scmp.eq.s32.totalorder %s34, 1
      %p183 = por %p181, %p182
      %p184 = scmp.ne.s32.totalorder %s175, %s176
      %p185 = scmp.eq.s32.totalorder %s34, 0
      %p186 = por %p184, %p185
      %p187 = scmp.ne.s32.totalorder %s175, %s176
      %p188 = scmp.eq.s32.totalorder %s35, 1
      %p189 = por %p187, %p188
      %p191 = scmp.ne.s32.totalorder %s176, %s190
      %p192 = scmp.eq.s32.totalorder %s35, 0
      %p193 = por %p191, %p192
      %s195 = sadd.s32 %s194, 1
      %p198 = scmp.eq.s32.totalorder %s29, 1
      %p199 = scmp.ne.s32.totalorder %s194, %s196
      %p200 = scmp.eq.s32.totalorder %s29, 0
      %p201 = por %p199, %p200
      %p202 = scmp.ne.s32.totalorder %s194, %s196
      %p203 = scmp.eq.s32.totalorder %s34, 1
      %p204 = por %p202, %p203
      %p205 = scmp.ne.s32.totalorder %s196, %s197
      %p206 = scmp.eq.s32.totalorder %s34, 0
      %p207 = por %p205, %p206
      %p208 = scmp.ne.s32.totalorder %s196, %s197
      %p209 = scmp.eq.s32.totalorder %s35, 1
      %p210 = por %p208, %p209
      %p212 = scmp.ne.s32.totalorder %s197, %s211
      %p213 = scmp.eq.s32.totalorder %s35, 0
      %p214 = por %p212, %p213
      %s216 = sadd.s32 %s215, 1
      %p219 = scmp.eq.s32.totalorder %s29, 1
      %p220 = scmp.ne.s32.totalorder %s215, %s217
      %p221 = scmp.eq.s32.totalorder %s29, 0
      %p222 = por %p220, %p221
      %p223 = scmp.ne.s32.totalorder %s215, %s217
      %p224 = scmp.eq.s32.totalorder %s34, 1
      %p225 = por %p223, %p224
      %p226 = scmp.ne.s32.totalorder %s217, %s218
      %p227 = scmp.eq.s32.totalorder %s34, 0
      %p228 = por %p226, %p227
      %p229 = scmp.ne.s32.totalorder %s217, %s218
      %p230 = scmp.eq.s32.totalorder %s35, 1
      %p231 = por %p229, %p230
      %p233 = scmp.ne.s32.totalorder %s218, %s232
      %p234 = scmp.eq.s32.totalorder %s35, 0
      %p235 = por %p233, %p234
      %s237 = sadd.s32 %s236, 1
      %p240 = scmp.eq.s32.totalorder %s29, 1
      %p241 = scmp.ne.s32.totalorder %s236, %s238
      %p242 = scmp.eq.s32.totalorder %s29, 0
      %p243 = por %p241, %p242
      %p244 = scmp.ne.s32.totalorder %s236, %s238
      %p245 = scmp.eq.s32.totalorder %s34, 1
      %p246 = por %p244, %p245
      %p247 = scmp.ne.s32.totalorder %s238, %s239
      %p248 = scmp.eq.s32.totalorder %s34, 0
      %p249 = por %p247, %p248
      %p250 = scmp.ne.s32.totalorder %s238, %s239
      %p251 = scmp.eq.s32.totalorder %s35, 1
      %p252 = por %p250, %p251
      %p254 = scmp.ne.s32.totalorder %s239, %s253
      %p255 = scmp.eq.s32.totalorder %s35, 0
      %p256 = por %p254, %p255
      %s258 = sadd.s32 %s257, 1
      %p261 = scmp.eq.s32.totalorder %s29, 1
      %p262 = scmp.ne.s32.totalorder %s257, %s259
      %p263 = scmp.eq.s32.totalorder %s29, 0
      %p264 = por %p262, %p263
      %p265 = scmp.ne.s32.totalorder %s257, %s259
      %p266 = scmp.eq.s32.totalorder %s34, 1
      %p267 = por %p265, %p266
      %p268 = scmp.ne.s32.totalorder %s259, %s260
      %p269 = scmp.eq.s32.totalorder %s34, 0
      %p270 = por %p268, %p269
      %p271 = scmp.ne.s32.totalorder %s259, %s260
      %p272 = scmp.eq.s32.totalorder %s35, 1
      %p273 = por %p271, %p272
      %p275 = scmp.ne.s32.totalorder %s260, %s274
      %p276 = scmp.eq.s32.totalorder %s35, 0
      %p277 = por %p275, %p276
      %s279 = sadd.s32 %s278, 1
      %p282 = scmp.eq.s32.totalorder %s29, 1
      %p283 = scmp.ne.s32.totalorder %s278, %s280
      %p284 = scmp.eq.s32.totalorder %s29, 0
      %p285 = por %p283, %p284
      %p286 = scmp.ne.s32.totalorder %s278, %s280
      %p287 = scmp.eq.s32.totalorder %s34, 1
      %p288 = por %p286, %p287
      %p289 = scmp.ne.s32.totalorder %s280, %s281
      %p290 = scmp.eq.s32.totalorder %s34, 0
      %p291 = por %p289, %p290
      %p292 = scmp.ne.s32.totalorder %s280, %s281
      %p293 = scmp.eq.s32.totalorder %s35, 1
      %p294 = por %p292, %p293
      %p296 = scmp.ne.s32.totalorder %s281, %s295
      %p297 = scmp.eq.s32.totalorder %s35, 0
      %p298 = por %p296, %p297
      %s300 = sadd.s32 %s299, 1
      %p303 = scmp.eq.s32.totalorder %s29, 1
      %p304 = scmp.ne.s32.totalorder %s299, %s301
      %p305 = scmp.eq.s32.totalorder %s29, 0
      %p306 = por %p304, %p305
      %p307 = scmp.ne.s32.totalorder %s299, %s301
      %p308 = scmp.eq.s32.totalorder %s34, 1
      %p309 = por %p307, %p308
      %p310 = scmp.ne.s32.totalorder %s301, %s302
      %p311 = scmp.eq.s32.totalorder %s34, 0
      %p312 = por %p310, %p311
      %p313 = scmp.ne.s32.totalorder %s301, %s302
      %p314 = scmp.eq.s32.totalorder %s35, 1
      %p315 = por %p313, %p314
      %p317 = scmp.ne.s32.totalorder %s302, %s316
      %p318 = scmp.eq.s32.totalorder %s35, 0
      %p319 = por %p317, %p318
      %s321 = sadd.s32 %s320, 1
      %p324 = scmp.eq.s32.totalorder %s29, 1
      %p325 = scmp.ne.s32.totalorder %s320, %s322
      %p326 = scmp.eq.s32.totalorder %s29, 0
      %p327 = por %p325, %p326
      %p328 = scmp.ne.s32.totalorder %s320, %s322
      %p329 = scmp.eq.s32.totalorder %s34, 1
      %p330 = por %p328, %p329
      %p331 = scmp.ne.s32.totalorder %s322, %s323
      %p332 = scmp.eq.s32.totalorder %s34, 0
      %p333 = por %p331, %p332
      %p334 = scmp.ne.s32.totalorder %s322, %s323
      %p335 = scmp.eq.s32.totalorder %s35, 1
      %p336 = por %p334, %p335
      %p338 = scmp.ne.s32.totalorder %s323, %s337
      %p339 = scmp.eq.s32.totalorder %s35, 0
      %p340 = por %p338, %p339
      %s341 = ssub.s32 %s29, %s36
      %p342 = scmp.eq.s32.totalorder %s341, 0
      %s344 = sadd.s32 %s343, 1
      %s345 = scalar_select %p342, %s343, %s344
      %p348 = pneg %p342
      %p349 = scmp.eq.s32.totalorder %s29, 1
      %p350 = por %p348, %p349
      %p351 = scmp.ne.s32.totalorder %s343, %s346
      %p352 = scmp.eq.s32.totalorder %s29, 0
      %p353 = por %p351, %p352
      %p354 = scmp.ne.s32.totalorder %s343, %s346
      %p355 = scmp.eq.s32.totalorder %s34, 1
      %p356 = por %p354, %p355
      %p357 = scmp.ne.s32.totalorder %s346, %s347
      %p358 = scmp.eq.s32.totalorder %s34, 0
      %p359 = por %p357, %p358
      %p360 = scmp.ne.s32.totalorder %s346, %s347
      %p361 = scmp.eq.s32.totalorder %s35, 1
      %p362 = por %p360, %p361
      %p364 = scmp.ne.s32.totalorder %s347, %s363
      %p365 = scmp.eq.s32.totalorder %s35, 0
      %p366 = por %p364, %p365
      %p367 = scmp.le.s32.totalorder 1, %s29
      %p368 = scmp.lt.s32.totalorder %s29, 3
      %p369 = pnand %p367, %p368
      %p370 = pneg %p369
      // Predicated region
      $region9: #{tpu_custom_call.1} parent=5 // pred_check
        _
      $region10: #{tpu_custom_call.1} parent=5 // pred_check_branch
        %372 = sbr.rel (%p369) target = $region12
      $region11: #{tpu_custom_call.1} parent=5 // pred_region
        %s373 = ssub.s32 %s29, 1
        // Predicated region
        $region13: #{tpu_custom_call.1} parent=11 // pred_check
          %p374 = pneg %p102
        $region14: #{tpu_custom_call.1} parent=11 // pred_check_branch
          %376 = sbr.rel (%p374) target = $region16
        $region15: #{tpu_custom_call.1} parent=11 // pred_region
          _
        $region16: #{tpu_custom_call.1} parent=11 // pred_fallthru
          _
        // Predicated region
        $region17: #{tpu_custom_call.1} parent=11 // pred_check
          %p377 = pneg %p123
        $region18: #{tpu_custom_call.1} parent=11 // pred_check_branch
          %379 = sbr.rel (%p377) target = $region20
        $region19: #{tpu_custom_call.1} parent=11 // pred_region
          _
        $region20: #{tpu_custom_call.1} parent=11 // pred_fallthru
          _
        // Predicated region
        $region21: #{tpu_custom_call.1} parent=11 // pred_check
          %p380 = pneg %p144
        $region22: #{tpu_custom_call.1} parent=11 // pred_check_branch
          %382 = sbr.rel (%p380) target = $region24
        $region23: #{tpu_custom_call.1} parent=11 // pred_region
          _
        $region24: #{tpu_custom_call.1} parent=11 // pred_fallthru
          _
        // Predicated region
        $region25: #{tpu_custom_call.1} parent=11 // pred_check
          %p383 = pneg %p165
        $region26: #{tpu_custom_call.1} parent=11 // pred_check_branch
          %385 = sbr.rel (%p383) target = $region28
        $region27: #{tpu_custom_call.1} parent=11 // pred_region
          _
        $region28: #{tpu_custom_call.1} parent=11 // pred_fallthru
          _
        // Predicated region
        $region29: #{tpu_custom_call.1} parent=11 // pred_check
          %p386 = pneg %p186
        $region30: #{tpu_custom_call.1} parent=11 // pred_check_branch
          %388 = sbr.rel (%p386) target = $region32
        $region31: #{tpu_custom_call.1} parent=11 // pred_region
          _
        $region32: #{tpu_custom_call.1} parent=11 // pred_fallthru
          _
        // Predicated region
        $region33: #{tpu_custom_call.1} parent=11 // pred_check
          %p389 = pneg %p207
        $region34: #{tpu_custom_call.1} parent=11 // pred_check_branch
          %391 = sbr.rel (%p389) target = $region36
        $region35: #{tpu_custom_call.1} parent=11 // pred_region
          _
        $region36: #{tpu_custom_call.1} parent=11 // pred_fallthru
          _
        // Predicated region
        $region37: #{tpu_custom_call.1} parent=11 // pred_check
          %p392 = pneg %p228
        $region38: #{tpu_custom_call.1} parent=11 // pred_check_branch
          %394 = sbr.rel (%p392) target = $region40
        $region39: #{tpu_custom_call.1} parent=11 // pred_region
          _
        $region40: #{tpu_custom_call.1} parent=11 // pred_fallthru
          _
        // Predicated region
        $region41: #{tpu_custom_call.1} parent=11 // pred_check
          %p395 = pneg %p249
        $region42: #{tpu_custom_call.1} parent=11 // pred_check_branch
          %397 = sbr.rel (%p395) target = $region44
        $region43: #{tpu_custom_call.1} parent=11 // pred_region
          _
        $region44: #{tpu_custom_call.1} parent=11 // pred_fallthru
          _
        // Predicated region
        $region45: #{tpu_custom_call.1} parent=11 // pred_check
          %p398 = pneg %p270
        $region46: #{tpu_custom_call.1} parent=11 // pred_check_branch
          %400 = sbr.rel (%p398) target = $region48
        $region47: #{tpu_custom_call.1} parent=11 // pred_region
          _
        $region48: #{tpu_custom_call.1} parent=11 // pred_fallthru
          _
        // Predicated region
        $region49: #{tpu_custom_call.1} parent=11 // pred_check
          %p401 = pneg %p291
        $region50: #{tpu_custom_call.1} parent=11 // pred_check_branch
          %403 = sbr.rel (%p401) target = $region52
        $region51: #{tpu_custom_call.1} parent=11 // pred_region
          _
        $region52: #{tpu_custom_call.1} parent=11 // pred_fallthru
          _
        // Predicated region
        $region53: #{tpu_custom_call.1} parent=11 // pred_check
          %p404 = pneg %p312
        $region54: #{tpu_custom_call.1} parent=11 // pred_check_branch
          %406 = sbr.rel (%p404) target = $region56
        $region55: #{tpu_custom_call.1} parent=11 // pred_region
          _
        $region56: #{tpu_custom_call.1} parent=11 // pred_fallthru
          _
        // Predicated region
        $region57: #{tpu_custom_call.1} parent=11 // pred_check
          %p407 = pneg %p333
        $region58: #{tpu_custom_call.1} parent=11 // pred_check_branch
          %409 = sbr.rel (%p407) target = $region60
        $region59: #{tpu_custom_call.1} parent=11 // pred_region
          _
        $region60: #{tpu_custom_call.1} parent=11 // pred_fallthru
          _
      $region12: #{tpu_custom_call.1} parent=5 // pred_fallthru
        _
      %p410 = scmp.lt.s32.totalorder %s29, 2
      // Predicated region
      $region61: #{tpu_custom_call.1} parent=5 // pred_check
        %p411 = pneg %p410
      $region62: #{tpu_custom_call.1} parent=5 // pred_check_branch
        %413 = sbr.rel (%p411) target = $region64
      $region63: #{tpu_custom_call.1} parent=5 // pred_region
        // Predicated region
        $region65: #{tpu_custom_call.1} parent=63 // pred_check
          %p414 = pneg %p49
        $region66: #{tpu_custom_call.1} parent=63 // pred_check_branch
          %416 = sbr.rel (%p414) target = $region68
        $region67: #{tpu_custom_call.1} parent=63 // pred_region
          %s417 = sand.u32 %s39, 1
          %s418 = scalar_lea.sflag [#allocation3], %s417
          %s419 = sand.u32 %s39, 1
          %s420 = smul.addr %s419, 8
          %s421 = scalar_lea.vmem [#allocation2], %s420
          %s423 = ssub.s32 128, 128
          %424 = vsyncadd %s418, %s423
          %s425 = smul.addr %s29, 128
          %s426 = scalar_lea.hbm %s0, %s425
          %s428 = sshll.u32 %s421, 4
          %s429 = int_to_ptr.vmem [resolvable:$true] %s428
          %431 = dma.hbm_to_vmem [thread:$0]  %s426, 128, %s429, %s418
        $region68: #{tpu_custom_call.1} parent=63 // pred_fallthru
          _
        // Predicated region
        $region69: #{tpu_custom_call.1} parent=63 // pred_check
          %p432 = pneg %p75
        $region70: #{tpu_custom_call.1} parent=63 // pred_check_branch
          %434 = sbr.rel (%p432) target = $region72
        $region71: #{tpu_custom_call.1} parent=63 // pred_region
          %s435 = sand.u32 %s65, 1
          %s436 = scalar_lea.sflag [#allocation6], %s435
          %s437 = sand.u32 %s65, 1
          %s438 = smul.addr %s437, 8
          %s439 = scalar_lea.vmem [#allocation5], %s438
          %s441 = ssub.s32 128, 128
          %442 = vsyncadd %s436, %s441
          %s443 = smul.addr %s29, 128
          %s444 = scalar_lea.hbm %s1, %s443
          %s446 = sshll.u32 %s439, 4
          %s447 = int_to_ptr.vmem [resolvable:$true] %s446
          %449 = dma.hbm_to_vmem [thread:$0]  %s444, 128, %s447, %s436
        $region72: #{tpu_custom_call.1} parent=63 // pred_fallthru
          _
      $region64: #{tpu_custom_call.1} parent=5 // pred_fallthru
        _
      %p450 = scmp.le.s32.totalorder 1, %s29
      %p451 = scmp.lt.s32.totalorder %s29, 3
      %p452 = pnand %p450, %p451
      %p453 = pneg %p452
      // Predicated region
      $region73: #{tpu_custom_call.1} parent=5 // pred_check
        _
      $region74: #{tpu_custom_call.1} parent=5 // pred_check_branch
        %455 = sbr.rel (%p452) target = $region76
      $region75: #{tpu_custom_call.1} parent=5 // pred_region
        %s456 = ssub.s32 %s29, 1
        %s457 = sand.u32 %s42, 1
        %s458 = scalar_lea.sflag [#allocation3], %s457
        %s459 = sand.u32 %s42, 1
        %s460 = smul.addr %s459, 8
        %s461 = scalar_lea.vmem [#allocation2], %s460
        // Predicated region
        $region77: #{tpu_custom_call.1} parent=75 // pred_check
          %p462 = pneg %p55
        $region78: #{tpu_custom_call.1} parent=75 // pred_check_branch
          %464 = sbr.rel (%p462) target = $region80
        $region79: #{tpu_custom_call.1} parent=75 // pred_region
          %465 = dma.done %s458, 128
        $region80: #{tpu_custom_call.1} parent=75 // pred_fallthru
          _
        %s466 = sand.u32 %s68, 1
        %s467 = scalar_lea.sflag [#allocation6], %s466
        %s468 = sand.u32 %s68, 1
        %s469 = smul.addr %s468, 8
        %s470 = scalar_lea.vmem [#allocation5], %s469
        // Predicated region
        $region81: #{tpu_custom_call.1} parent=75 // pred_check
          %p471 = pneg %p81
        $region82: #{tpu_custom_call.1} parent=75 // pred_check_branch
          %473 = sbr.rel (%p471) target = $region84
        $region83: #{tpu_custom_call.1} parent=75 // pred_region
          %474 = dma.done %s467, 128
        $region84: #{tpu_custom_call.1} parent=75 // pred_fallthru
          _
        %s475 = sand.u32 %s42, 1
        %s476 = scalar_lea.sflag [#allocation3], %s475
        %s477 = sand.u32 %s42, 1
        %s478 = smul.addr %s477, 8
        %s479 = scalar_lea.vmem [#allocation2], %s478
        %p480 = pneg %p55
        %p481 = pneg %p52
        %s482 = sand.u32 %s68, 1
        %s483 = scalar_lea.sflag [#allocation6], %s482
        %s484 = sand.u32 %s68, 1
        %s485 = smul.addr %s484, 8
        %s486 = scalar_lea.vmem [#allocation5], %s485
        %p487 = pneg %p81
        %p488 = pneg %p78
        %p489 = pneg %p102
        %p490 = pneg %p99
        %p491 = pneg %p123
        %p492 = pneg %p120
        %p493 = pneg %p144
        %p494 = pneg %p141
        %p495 = pneg %p165
        %p496 = pneg %p162
        %p497 = pneg %p186
        %p498 = pneg %p183
        %p499 = pneg %p207
        %p500 = pneg %p204
        %p501 = pneg %p228
        %p502 = pneg %p225
        %p503 = pneg %p249
        %p504 = pneg %p246
        %p505 = pneg %p270
        %p506 = pneg %p267
        %p507 = pneg %p291
        %p508 = pneg %p288
        %p509 = pneg %p312
        %p510 = pneg %p309
        %p511 = pneg %p333
        %p512 = pneg %p330
        %p513 = pneg %p359
        %p514 = pneg %p356
        %s515 = sand.u32 %s346, 1
        %s516 = scalar_lea.sflag [#allocation4], %s515
        %s517 = sand.u32 %s346, 1
        %s518 = smul.addr %s517, 8
        %s519 = scalar_lea.vmem [#allocation7], %s518
        %v520 = vld [vmem:[%s461] sm:$0xff]
        %v521 = vld [vmem:[%s470] sm:$0xff]
        %v522 = vld [vmem:[%s2] sm:$0xff]
        %v523 = vld [vmem:[%s2 + $0x8] sm:$0xff]
        %v524 = vld [vmem:[%s2 + $0x10] sm:$0xff]
        %v525 = vld [vmem:[%s2 + $0x18] sm:$0xff]
        %v526 = vld [vmem:[%s3] sm:$0x1]
        %v528 = vlaneseq
        %v529 = vshrl.u32 %v528, 7
        %v530 = vsub.s32 0, %v529
        %v531 = vrot.slane %v526, %v530
        %vm533 = vcmask 261120
        %v535 = vsel %vm533, %v520, 0
        %v538 = vsel %vm533, %v521, 0
        %540 = vmatprep.subr.mxu0 0.0
        %541 = vmatpush1.msra.mxu0 %v522
        %542 = vmatprep.subr.mxu0 0.0
        %543 = vmatpush1.msra.mxu0 %v523
        %544 = vmatprep.subr.mxu0 0.0
        %545 = vmatpush1.msra.mxu0 %v524
        %546 = vmatprep.subr.mxu0 0.0
        %547 = vmatpush1.msra.mxu0 %v525
        %548 = vmatprep.subr.mxu0 0.0
        %549 = vmatpush1.msra.mxu0 0.0
        %550 = vmatprep.subr.mxu0 0.0
        %551 = vmatpush1.msra.mxu0 0.0
        %552 = vmatprep.subr.mxu0 0.0
        %553 = vmatpush1.msra.mxu0 0.0
        %554 = vmatprep.subr.mxu0 0.0
        %555 = vmatpush1.msra.mxu0 0.0
        %556 = vmatprep.subr.mxu0 0.0
        %557 = vmatpush1.msra.mxu0 0.0
        %558 = vmatprep.subr.mxu0 0.0
        %559 = vmatpush1.msra.mxu0 0.0
        %560 = vmatprep.subr.mxu0 0.0
        %561 = vmatpush1.msra.mxu0 0.0
        %562 = vmatprep.subr.mxu0 0.0
        %563 = vmatpush1.msra.mxu0 0.0
        %564 = vmatprep.subr.mxu0 0.0
        %565 = vmatpush1.msra.mxu0 0.0
        %566 = vmatprep.subr.mxu0 0.0
        %567 = vmatpush1.msra.mxu0 0.0
        %568 = vmatprep.subr.mxu0 0.0
        %569 = vmatpush1.msra.mxu0 0.0
        %570 = vmatprep.subr.mxu0 0.0
        %571 = vmatpush1.msra.mxu0 0.0
        %572 = vmatprep.subr.mxu0 0.0
        %573 = vmatpush1.msra.mxu0 0.0
        %574 = vmatprep.subr.mxu0 0.0
        %575 = vmatpush1.msra.mxu0 0.0
        %576 = vmatprep.subr.mxu0 0.0
        %577 = vmatpush1.msra.mxu0 0.0
        %578 = vmatprep.subr.mxu0 0.0
        %579 = vmatpush1.msra.mxu0 0.0
        %580 = vmatprep.subr.mxu0 0.0
        %581 = vmatpush1.msra.mxu0 0.0
        %582 = vmatprep.subr.mxu0 0.0
        %583 = vmatpush1.msra.mxu0 0.0
        %584 = vmatprep.subr.mxu0 0.0
        %585 = vmatpush1.msra.mxu0 0.0
        %586 = vmatprep.subr.mxu0 0.0
        %587 = vmatpush1.msra.mxu0 0.0
        %588 = vmatprep.subr.mxu0 0.0
        %589 = vmatpush1.msra.mxu0 0.0
        %590 = vmatprep.subr.mxu0 0.0
        %591 = vmatpush1.msra.mxu0 0.0
        %592 = vmatprep.subr.mxu0 0.0
        %593 = vmatpush1.msra.mxu0 0.0
        %594 = vmatprep.subr.mxu0 0.0
        %595 = vmatpush1.msra.mxu0 0.0
        %596 = vmatprep.subr.mxu0 0.0
        %597 = vmatpush1.msra.mxu0 0.0
        %598 = vmatprep.subr.mxu0 0.0
        %599 = vmatpush1.msra.mxu0 0.0
        %600 = vmatprep.subr.mxu0 0.0
        %601 = vmatpush1.msra.mxu0 0.0
        %602 = vmatprep.subr.mxu0 0.0
        %603 = vmatpush1.msra.mxu0 0.0
        %604 = vmatprep.mubr.f32.mxu0 0.0
        %605 = vmatmul.mubr.f32.gmra.mrb[0].mxu0 %v535
        %v606 = vpop.f32.mrb[0].mxu0
        %v607 = vadd.f32 %v531, %v606
        %v608 = vpop.f32.mrb[0].mxu0
        %609 = vmatprep.mubr.f32.mxu0 0.0
        %610 = vmatmul.mubr.f32.gmra.mrb[0].mxu0 %v538
        %v611 = vpop.f32.mrb[0].mxu0
        %v612 = vadd.f32 %v531, %v611
        %v613 = vpop.f32.mrb[0].mxu0
        %614 = vdwg.mxu0
        %v615 = vmul.f32 %v607, 0.35355338
        %618 = vrot.lane.b32.xlu0 %v607, 96
        %v619 = vpop.permute.xlu0 %618
        %620 = vrot.lane.b32.xlu0 %v612, 96
        %v621 = vpop.permute.xlu0 %620
        %vm622 = vcmask 64512
        %v624 = vsel %vm622, %v615, 0
        %v626 = vsel %vm622, %v619, 0
        %v628 = vsel %vm622, %v621, 0
        %630 = vmatprep.subr.mxu0 0.0
        %631 = vmatpush1.xpose.msra.mxu0 %v626
        %632 = vmatprep.subr.mxu0 0.0
        %633 = vmatpush1.xpose.msra.mxu0 %v628
        %634 = vmatprep.subr.mxu0 0.0
        %635 = vmatpush1.xpose.msra.mxu0 0.0
        %636 = vmatprep.subr.mxu0 0.0
        %637 = vmatpush1.xpose.msra.mxu0 0.0
        %638 = vmatprep.subr.mxu0 0.0
        %639 = vmatpush1.xpose.msra.mxu0 0.0
        %640 = vmatprep.subr.mxu0 0.0
        %641 = vmatpush1.xpose.msra.mxu0 0.0
        %642 = vmatprep.subr.mxu0 0.0
        %643 = vmatpush1.xpose.msra.mxu0 0.0
        %644 = vmatprep.subr.mxu0 0.0
        %645 = vmatpush1.xpose.msra.mxu0 0.0
        %646 = vmatprep.subr.mxu0 0.0
        %647 = vmatpush1.xpose.msra.mxu0 0.0
        %648 = vmatprep.subr.mxu0 0.0
        %649 = vmatpush1.xpose.msra.mxu0 0.0
        %650 = vmatprep.subr.mxu0 0.0
        %651 = vmatpush1.xpose.msra.mxu0 0.0
        %652 = vmatprep.subr.mxu0 0.0
        %653 = vmatpush1.xpose.msra.mxu0 0.0
        %654 = vmatprep.subr.mxu0 0.0
        %655 = vmatpush1.xpose.msra.mxu0 0.0
        %656 = vmatprep.subr.mxu0 0.0
        %657 = vmatpush1.xpose.msra.mxu0 0.0
        %658 = vmatprep.subr.mxu0 0.0
        %659 = vmatpush1.xpose.msra.mxu0 0.0
        %660 = vmatprep.subr.mxu0 0.0
        %661 = vmatpush1.xpose.msra.mxu0 0.0
        %662 = vmatprep.subr.mxu0 0.0
        %663 = vmatpush1.xpose.msra.mxu0 0.0
        %664 = vmatprep.subr.mxu0 0.0
        %665 = vmatpush1.xpose.msra.mxu0 0.0
        %666 = vmatprep.subr.mxu0 0.0
        %667 = vmatpush1.xpose.msra.mxu0 0.0
        %668 = vmatprep.subr.mxu0 0.0
        %669 = vmatpush1.xpose.msra.mxu0 0.0
        %670 = vmatprep.subr.mxu0 0.0
        %671 = vmatpush1.xpose.msra.mxu0 0.0
        %672 = vmatprep.subr.mxu0 0.0
        %673 = vmatpush1.xpose.msra.mxu0 0.0
        %674 = vmatprep.subr.mxu0 0.0
        %675 = vmatpush1.xpose.msra.mxu0 0.0
        %676 = vmatprep.subr.mxu0 0.0
        %677 = vmatpush1.xpose.msra.mxu0 0.0
        %678 = vmatprep.subr.mxu0 0.0
        %679 = vmatpush1.xpose.msra.mxu0 0.0
        %680 = vmatprep.subr.mxu0 0.0
        %681 = vmatpush1.xpose.msra.mxu0 0.0
        %682 = vmatprep.subr.mxu0 0.0
        %683 = vmatpush1.xpose.msra.mxu0 0.0
        %684 = vmatprep.subr.mxu0 0.0
        %685 = vmatpush1.xpose.msra.mxu0 0.0
        %686 = vmatprep.subr.mxu0 0.0
        %687 = vmatpush1.xpose.msra.mxu0 0.0
        %688 = vmatprep.subr.mxu0 0.0
        %689 = vmatpush1.xpose.msra.mxu0 0.0
        %690 = vmatprep.subr.mxu0 0.0
        %691 = vmatpush1.xpose.msra.mxu0 0.0
        %692 = vmatprep.subr.mxu0 0.0
        %693 = vmatpush1.xpose.msra.mxu0 0.0
        %694 = vmatprep.mubr.f32.mxu0 0.0
        %695 = vmatmul.mubr.f32.gmra.mrb[0].mxu0 %v624
        %v696 = vpop.f32.mrb[0].mxu0
        %v697 = vadd.f32 0.0, %v696
        %v698 = vpop.f32.mrb[0].mxu0
        %699 = vdwg.mxu0
        %v700 = vsel %vm622, %v697, -inf
        %701 = vmax.xlane.f32.xlu0 %v700
        %v702 = vpop.xlane.xlu0 %701
        %v703 = vsub.f32 %v697, %v702
        %v704 = vmul.f32 %v703, 1.442695
        %v705 = vpow.pop %v704
        %vm706 = vcmask 130112
        %v707 = vsel %vm706, %v697, -inf
        %708 = vmax.xlane.f32.xlu0 %v707
        %v709 = vpop.xlane.xlu0 %708
        %v710 = vsub.f32 %v697, %v709
        %v711 = vmul.f32 %v710, 1.442695
        %v712 = vpow.pop %v711
        %v713 = vsel %vm622, %v705, 0.0
        %714 = vadd.xlane.f32.xlu0 %v713
        %v715 = vpop.xlane.xlu0 %714
        %v716 = vrcp.pop %v715
        %v717 = vmul.f32 %v716, 0.5
        %v718 = vmul.f32 %v705, %v717
        %720 = vrot.lane.b32.xlu0 %v712, 120
        %v721 = vpop.permute.xlu0 %720
        %v723 = vsel %vm622, %v721, 0.0
        %724 = vadd.xlane.f32.xlu0 %v723
        %v725 = vpop.xlane.xlu0 %724
        %v726 = vrcp.pop %v725
        %v727 = vmul.f32 %v726, 0.5
        %v728 = vmul.f32 %v712, %v727
        %v729 = vsel %vm622, %v718, %v728
        %730 = vrot.lane.b32.xlu0 %v607, 64
        %v731 = vpop.permute.xlu0 %730
        %732 = vrot.lane.b32.xlu0 %v612, 64
        %v733 = vpop.permute.xlu0 %732
        %vm736 = vcmask 130048
        %v738 = vsel %vm736, %v729, 0
        %740 = vmatprep.subr.mxu0 0.0
        %741 = vmatpush1.msra.mxu0 %v731
        %742 = vmatprep.subr.mxu0 0.0
        %743 = vmatpush1.msra.mxu0 %v733
        %744 = vmatprep.subr.mxu0 0.0
        %745 = vmatpush1.msra.mxu0 0.0
        %746 = vmatprep.subr.mxu0 0.0
        %747 = vmatpush1.msra.mxu0 0.0
        %748 = vmatprep.subr.mxu0 0.0
        %749 = vmatpush1.msra.mxu0 0.0
        %750 = vmatprep.subr.mxu0 0.0
        %751 = vmatpush1.msra.mxu0 0.0
        %752 = vmatprep.subr.mxu0 0.0
        %753 = vmatpush1.msra.mxu0 0.0
        %754 = vmatprep.subr.mxu0 0.0
        %755 = vmatpush1.msra.mxu0 0.0
        %756 = vmatprep.subr.mxu0 0.0
        %757 = vmatpush1.msra.mxu0 0.0
        %758 = vmatprep.subr.mxu0 0.0
        %759 = vmatpush1.msra.mxu0 0.0
        %760 = vmatprep.subr.mxu0 0.0
        %761 = vmatpush1.msra.mxu0 0.0
        %762 = vmatprep.subr.mxu0 0.0
        %763 = vmatpush1.msra.mxu0 0.0
        %764 = vmatprep.subr.mxu0 0.0
        %765 = vmatpush1.msra.mxu0 0.0
        %766 = vmatprep.subr.mxu0 0.0
        %767 = vmatpush1.msra.mxu0 0.0
        %768 = vmatprep.subr.mxu0 0.0
        %769 = vmatpush1.msra.mxu0 0.0
        %770 = vmatprep.subr.mxu0 0.0
        %771 = vmatpush1.msra.mxu0 0.0
        %772 = vmatprep.subr.mxu0 0.0
        %773 = vmatpush1.msra.mxu0 0.0
        %774 = vmatprep.subr.mxu0 0.0
        %775 = vmatpush1.msra.mxu0 0.0
        %776 = vmatprep.subr.mxu0 0.0
        %777 = vmatpush1.msra.mxu0 0.0
        %778 = vmatprep.subr.mxu0 0.0
        %779 = vmatpush1.msra.mxu0 0.0
        %780 = vmatprep.subr.mxu0 0.0
        %781 = vmatpush1.msra.mxu0 0.0
        %782 = vmatprep.subr.mxu0 0.0
        %783 = vmatpush1.msra.mxu0 0.0
        %784 = vmatprep.subr.mxu0 0.0
        %785 = vmatpush1.msra.mxu0 0.0
        %786 = vmatprep.subr.mxu0 0.0
        %787 = vmatpush1.msra.mxu0 0.0
        %788 = vmatprep.subr.mxu0 0.0
        %789 = vmatpush1.msra.mxu0 0.0
        %790 = vmatprep.subr.mxu0 0.0
        %791 = vmatpush1.msra.mxu0 0.0
        %792 = vmatprep.subr.mxu0 0.0
        %793 = vmatpush1.msra.mxu0 0.0
        %794 = vmatprep.subr.mxu0 0.0
        %795 = vmatpush1.msra.mxu0 0.0
        %796 = vmatprep.subr.mxu0 0.0
        %797 = vmatpush1.msra.mxu0 0.0
        %798 = vmatprep.subr.mxu0 0.0
        %799 = vmatpush1.msra.mxu0 0.0
        %800 = vmatprep.subr.mxu0 0.0
        %801 = vmatpush1.msra.mxu0 0.0
        %802 = vmatprep.subr.mxu0 0.0
        %803 = vmatpush1.msra.mxu0 0.0
        %804 = vmatprep.mubr.f32.mxu0 0.0
        %805 = vmatmul.mubr.f32.gmra.mrb[0].mxu0 %v738
        %v806 = vpop.f32.mrb[0].mxu0
        %v807 = vadd.f32 0.0, %v806
        %v808 = vpop.f32.mrb[0].mxu0
        %809 = vdwg.mxu0
        %810 = vrot.lane.b32.xlu0 %v615, 120
        %v811 = vpop.permute.xlu0 %810
        %812 = vrot.lane.b32.xlu0 %v607, 88
        %v813 = vpop.permute.xlu0 %812
        %814 = vrot.lane.b32.xlu0 %v612, 88
        %v815 = vpop.permute.xlu0 %814
        %v816 = vsel %vm622, %v811, 0
        %v818 = vsel %vm622, %v813, 0
        %v820 = vsel %vm622, %v815, 0
        %822 = vmatprep.subr.mxu0 0.0
        %823 = vmatpush1.xpose.msra.mxu0 %v818
        %824 = vmatprep.subr.mxu0 0.0
        %825 = vmatpush1.xpose.msra.mxu0 %v820
        %826 = vmatprep.subr.mxu0 0.0
        %827 = vmatpush1.xpose.msra.mxu0 0.0
        %828 = vmatprep.subr.mxu0 0.0
        %829 = vmatpush1.xpose.msra.mxu0 0.0
        %830 = vmatprep.subr.mxu0 0.0
        %831 = vmatpush1.xpose.msra.mxu0 0.0
        %832 = vmatprep.subr.mxu0 0.0
        %833 = vmatpush1.xpose.msra.mxu0 0.0
        %834 = vmatprep.subr.mxu0 0.0
        %835 = vmatpush1.xpose.msra.mxu0 0.0
        %836 = vmatprep.subr.mxu0 0.0
        %837 = vmatpush1.xpose.msra.mxu0 0.0
        %838 = vmatprep.subr.mxu0 0.0
        %839 = vmatpush1.xpose.msra.mxu0 0.0
        %840 = vmatprep.subr.mxu0 0.0
        %841 = vmatpush1.xpose.msra.mxu0 0.0
        %842 = vmatprep.subr.mxu0 0.0
        %843 = vmatpush1.xpose.msra.mxu0 0.0
        %844 = vmatprep.subr.mxu0 0.0
        %845 = vmatpush1.xpose.msra.mxu0 0.0
        %846 = vmatprep.subr.mxu0 0.0
        %847 = vmatpush1.xpose.msra.mxu0 0.0
        %848 = vmatprep.subr.mxu0 0.0
        %849 = vmatpush1.xpose.msra.mxu0 0.0
        %850 = vmatprep.subr.mxu0 0.0
        %851 = vmatpush1.xpose.msra.mxu0 0.0
        %852 = vmatprep.subr.mxu0 0.0
        %853 = vmatpush1.xpose.msra.mxu0 0.0
        %854 = vmatprep.subr.mxu0 0.0
        %855 = vmatpush1.xpose.msra.mxu0 0.0
        %856 = vmatprep.subr.mxu0 0.0
        %857 = vmatpush1.xpose.msra.mxu0 0.0
        %858 = vmatprep.subr.mxu0 0.0
        %859 = vmatpush1.xpose.msra.mxu0 0.0
        %860 = vmatprep.subr.mxu0 0.0
        %861 = vmatpush1.xpose.msra.mxu0 0.0
        %862 = vmatprep.subr.mxu0 0.0
        %863 = vmatpush1.xpose.msra.mxu0 0.0
        %864 = vmatprep.subr.mxu0 0.0
        %865 = vmatpush1.xpose.msra.mxu0 0.0
        %866 = vmatprep.subr.mxu0 0.0
        %867 = vmatpush1.xpose.msra.mxu0 0.0
        %868 = vmatprep.subr.mxu0 0.0
        %869 = vmatpush1.xpose.msra.mxu0 0.0
        %870 = vmatprep.subr.mxu0 0.0
        %871 = vmatpush1.xpose.msra.mxu0 0.0
        %872 = vmatprep.subr.mxu0 0.0
        %873 = vmatpush1.xpose.msra.mxu0 0.0
        %874 = vmatprep.subr.mxu0 0.0
        %875 = vmatpush1.xpose.msra.mxu0 0.0
        %876 = vmatprep.subr.mxu0 0.0
        %877 = vmatpush1.xpose.msra.mxu0 0.0
        %878 = vmatprep.subr.mxu0 0.0
        %879 = vmatpush1.xpose.msra.mxu0 0.0
        %880 = vmatprep.subr.mxu0 0.0
        %881 = vmatpush1.xpose.msra.mxu0 0.0
        %882 = vmatprep.subr.mxu0 0.0
        %883 = vmatpush1.xpose.msra.mxu0 0.0
        %884 = vmatprep.subr.mxu0 0.0
        %885 = vmatpush1.xpose.msra.mxu0 0.0
        %886 = vmatprep.mubr.f32.mxu0 0.0
        %887 = vmatmul.mubr.f32.gmra.mrb[0].mxu0 %v816
        %v888 = vpop.f32.mrb[0].mxu0
        %v889 = vadd.f32 0.0, %v888
        %v890 = vpop.f32.mrb[0].mxu0
        %891 = vdwg.mxu0
        %v892 = vsel %vm622, %v889, -inf
        %893 = vmax.xlane.f32.xlu0 %v892
        %v894 = vpop.xlane.xlu0 %893
        %v895 = vsub.f32 %v889, %v894
        %v896 = vmul.f32 %v895, 1.442695
        %v897 = vpow.pop %v896
        %v898 = vsel %vm706, %v889, -inf
        %899 = vmax.xlane.f32.xlu0 %v898
        %v900 = vpop.xlane.xlu0 %899
        %v901 = vsub.f32 %v889, %v900
        %v902 = vmul.f32 %v901, 1.442695
        %v903 = vpow.pop %v902
        %v904 = vsel %vm622, %v897, 0.0
        %905 = vadd.xlane.f32.xlu0 %v904
        %v906 = vpop.xlane.xlu0 %905
        %v907 = vrcp.pop %v906
        %v908 = vmul.f32 %v907, 0.5
        %v909 = vmul.f32 %v897, %v908
        %911 = vrot.lane.b32.xlu0 %v903, 120
        %v912 = vpop.permute.xlu0 %911
        %v914 = vsel %vm622, %v912, 0.0
        %915 = vadd.xlane.f32.xlu0 %v914
        %v916 = vpop.xlane.xlu0 %915
        %v917 = vrcp.pop %v916
        %v918 = vmul.f32 %v917, 0.5
        %v919 = vmul.f32 %v903, %v918
        %v920 = vsel %vm622, %v909, %v919
        %921 = vrot.lane.b32.xlu0 %v607, 56
        %v922 = vpop.permute.xlu0 %921
        %923 = vrot.lane.b32.xlu0 %v612, 56
        %v924 = vpop.permute.xlu0 %923
        %v928 = vsel %vm736, %v920, 0
        %930 = vmatprep.subr.mxu0 0.0
        %931 = vmatpush1.msra.mxu0 %v922
        %932 = vmatprep.subr.mxu0 0.0
        %933 = vmatpush1.msra.mxu0 %v924
        %934 = vmatprep.subr.mxu0 0.0
        %935 = vmatpush1.msra.mxu0 0.0
        %936 = vmatprep.subr.mxu0 0.0
        %937 = vmatpush1.msra.mxu0 0.0
        %938 = vmatprep.subr.mxu0 0.0
        %939 = vmatpush1.msra.mxu0 0.0
        %940 = vmatprep.subr.mxu0 0.0
        %941 = vmatpush1.msra.mxu0 0.0
        %942 = vmatprep.subr.mxu0 0.0
        %943 = vmatpush1.msra.mxu0 0.0
        %944 = vmatprep.subr.mxu0 0.0
        %945 = vmatpush1.msra.mxu0 0.0
        %946 = vmatprep.subr.mxu0 0.0
        %947 = vmatpush1.msra.mxu0 0.0
        %948 = vmatprep.subr.mxu0 0.0
        %949 = vmatpush1.msra.mxu0 0.0
        %950 = vmatprep.subr.mxu0 0.0
        %951 = vmatpush1.msra.mxu0 0.0
        %952 = vmatprep.subr.mxu0 0.0
        %953 = vmatpush1.msra.mxu0 0.0
        %954 = vmatprep.subr.mxu0 0.0
        %955 = vmatpush1.msra.mxu0 0.0
        %956 = vmatprep.subr.mxu0 0.0
        %957 = vmatpush1.msra.mxu0 0.0
        %958 = vmatprep.subr.mxu0 0.0
        %959 = vmatpush1.msra.mxu0 0.0
        %960 = vmatprep.subr.mxu0 0.0
        %961 = vmatpush1.msra.mxu0 0.0
        %962 = vmatprep.subr.mxu0 0.0
        %963 = vmatpush1.msra.mxu0 0.0
        %964 = vmatprep.subr.mxu0 0.0
        %965 = vmatpush1.msra.mxu0 0.0
        %966 = vmatprep.subr.mxu0 0.0
        %967 = vmatpush1.msra.mxu0 0.0
        %968 = vmatprep.subr.mxu0 0.0
        %969 = vmatpush1.msra.mxu0 0.0
        %970 = vmatprep.subr.mxu0 0.0
        %971 = vmatpush1.msra.mxu0 0.0
        %972 = vmatprep.subr.mxu0 0.0
        %973 = vmatpush1.msra.mxu0 0.0
        %974 = vmatprep.subr.mxu0 0.0
        %975 = vmatpush1.msra.mxu0 0.0
        %976 = vmatprep.subr.mxu0 0.0
        %977 = vmatpush1.msra.mxu0 0.0
        %978 = vmatprep.subr.mxu0 0.0
        %979 = vmatpush1.msra.mxu0 0.0
        %980 = vmatprep.subr.mxu0 0.0
        %981 = vmatpush1.msra.mxu0 0.0
        %982 = vmatprep.subr.mxu0 0.0
        %983 = vmatpush1.msra.mxu0 0.0
        %984 = vmatprep.subr.mxu0 0.0
        %985 = vmatpush1.msra.mxu0 0.0
        %986 = vmatprep.subr.mxu0 0.0
        %987 = vmatpush1.msra.mxu0 0.0
        %988 = vmatprep.subr.mxu0 0.0
        %989 = vmatpush1.msra.mxu0 0.0
        %990 = vmatprep.subr.mxu0 0.0
        %991 = vmatpush1.msra.mxu0 0.0
        %992 = vmatprep.subr.mxu0 0.0
        %993 = vmatpush1.msra.mxu0 0.0
        %994 = vmatprep.mubr.f32.mxu0 0.0
        %995 = vmatmul.mubr.f32.gmra.mrb[0].mxu0 %v928
        %v996 = vpop.f32.mrb[0].mxu0
        %v997 = vadd.f32 0.0, %v996
        %v998 = vpop.f32.mrb[0].mxu0
        %999 = vdwg.mxu0
        %1000 = vrot.lane.b32.xlu0 %v615, 112
        %v1001 = vpop.permute.xlu0 %1000
        %1002 = vrot.lane.b32.xlu0 %v607, 80
        %v1003 = vpop.permute.xlu0 %1002
        %1004 = vrot.lane.b32.xlu0 %v612, 80
        %v1005 = vpop.permute.xlu0 %1004
        %v1006 = vsel %vm622, %v1001, 0
        %v1008 = vsel %vm622, %v1003, 0
        %v1010 = vsel %vm622, %v1005, 0
        %1012 = vmatprep.subr.mxu0 0.0
        %1013 = vmatpush1.xpose.msra.mxu0 %v1008
        %1014 = vmatprep.subr.mxu0 0.0
        %1015 = vmatpush1.xpose.msra.mxu0 %v1010
        %1016 = vmatprep.subr.mxu0 0.0
        %1017 = vmatpush1.xpose.msra.mxu0 0.0
        %1018 = vmatprep.subr.mxu0 0.0
        %1019 = vmatpush1.xpose.msra.mxu0 0.0
        %1020 = vmatprep.subr.mxu0 0.0
        %1021 = vmatpush1.xpose.msra.mxu0 0.0
        %1022 = vmatprep.subr.mxu0 0.0
        %1023 = vmatpush1.xpose.msra.mxu0 0.0
        %1024 = vmatprep.subr.mxu0 0.0
        %1025 = vmatpush1.xpose.msra.mxu0 0.0
        %1026 = vmatprep.subr.mxu0 0.0
        %1027 = vmatpush1.xpose.msra.mxu0 0.0
        %1028 = vmatprep.subr.mxu0 0.0
        %1029 = vmatpush1.xpose.msra.mxu0 0.0
        %1030 = vmatprep.subr.mxu0 0.0
        %1031 = vmatpush1.xpose.msra.mxu0 0.0
        %1032 = vmatprep.subr.mxu0 0.0
        %1033 = vmatpush1.xpose.msra.mxu0 0.0
        %1034 = vmatprep.subr.mxu0 0.0
        %1035 = vmatpush1.xpose.msra.mxu0 0.0
        %1036 = vmatprep.subr.mxu0 0.0
        %1037 = vmatpush1.xpose.msra.mxu0 0.0
        %1038 = vmatprep.subr.mxu0 0.0
        %1039 = vmatpush1.xpose.msra.mxu0 0.0
        %1040 = vmatprep.subr.mxu0 0.0
        %1041 = vmatpush1.xpose.msra.mxu0 0.0
        %1042 = vmatprep.subr.mxu0 0.0
        %1043 = vmatpush1.xpose.msra.mxu0 0.0
        %1044 = vmatprep.subr.mxu0 0.0
        %1045 = vmatpush1.xpose.msra.mxu0 0.0
        %1046 = vmatprep.subr.mxu0 0.0
        %1047 = vmatpush1.xpose.msra.mxu0 0.0
        %1048 = vmatprep.subr.mxu0 0.0
        %1049 = vmatpush1.xpose.msra.mxu0 0.0
        %1050 = vmatprep.subr.mxu0 0.0
        %1051 = vmatpush1.xpose.msra.mxu0 0.0
        %1052 = vmatprep.subr.mxu0 0.0
        %1053 = vmatpush1.xpose.msra.mxu0 0.0
        %1054 = vmatprep.subr.mxu0 0.0
        %1055 = vmatpush1.xpose.msra.mxu0 0.0
        %1056 = vmatprep.subr.mxu0 0.0
        %1057 = vmatpush1.xpose.msra.mxu0 0.0
        %1058 = vmatprep.subr.mxu0 0.0
        %1059 = vmatpush1.xpose.msra.mxu0 0.0
        %1060 = vmatprep.subr.mxu0 0.0
        %1061 = vmatpush1.xpose.msra.mxu0 0.0
        %1062 = vmatprep.subr.mxu0 0.0
        %1063 = vmatpush1.xpose.msra.mxu0 0.0
        %1064 = vmatprep.subr.mxu0 0.0
        %1065 = vmatpush1.xpose.msra.mxu0 0.0
        %1066 = vmatprep.subr.mxu0 0.0
        %1067 = vmatpush1.xpose.msra.mxu0 0.0
        %1068 = vmatprep.subr.mxu0 0.0
        %1069 = vmatpush1.xpose.msra.mxu0 0.0
        %1070 = vmatprep.subr.mxu0 0.0
        %1071 = vmatpush1.xpose.msra.mxu0 0.0
        %1072 = vmatprep.subr.mxu0 0.0
        %1073 = vmatpush1.xpose.msra.mxu0 0.0
        %1074 = vmatprep.subr.mxu0 0.0
        %1075 = vmatpush1.xpose.msra.mxu0 0.0
        %1076 = vmatprep.mubr.f32.mxu0 0.0
        %1077 = vmatmul.mubr.f32.gmra.mrb[0].mxu0 %v1006
        %v1078 = vpop.f32.mrb[0].mxu0
        %v1079 = vadd.f32 0.0, %v1078
        %v1080 = vpop.f32.mrb[0].mxu0
        %1081 = vdwg.mxu0
        %v1082 = vsel %vm622, %v1079, -inf
        %1083 = vmax.xlane.f32.xlu0 %v1082
        %v1084 = vpop.xlane.xlu0 %1083
        %v1085 = vsub.f32 %v1079, %v1084
        %v1086 = vmul.f32 %v1085, 1.442695
        %v1087 = vpow.pop %v1086
        %v1088 = vsel %vm706, %v1079, -inf
        %1089 = vmax.xlane.f32.xlu0 %v1088
        %v1090 = vpop.xlane.xlu0 %1089
        %v1091 = vsub.f32 %v1079, %v1090
        %v1092 = vmul.f32 %v1091, 1.442695
        %v1093 = vpow.pop %v1092
        %v1094 = vsel %vm622, %v1087, 0.0
        %1095 = vadd.xlane.f32.xlu0 %v1094
        %v1096 = vpop.xlane.xlu0 %1095
        %v1097 = vrcp.pop %v1096
        %v1098 = vmul.f32 %v1097, 0.5
        %v1099 = vmul.f32 %v1087, %v1098
        %1101 = vrot.lane.b32.xlu0 %v1093, 120
        %v1102 = vpop.permute.xlu0 %1101
        %v1104 = vsel %vm622, %v1102, 0.0
        %1105 = vadd.xlane.f32.xlu0 %v1104
        %v1106 = vpop.xlane.xlu0 %1105
        %v1107 = vrcp.pop %v1106
        %v1108 = vmul.f32 %v1107, 0.5
        %v1109 = vmul.f32 %v1093, %v1108
        %v1110 = vsel %vm622, %v1099, %v1109
        %1111 = vrot.lane.b32.xlu0 %v607, 48
        %v1112 = vpop.permute.xlu0 %1111
        %1113 = vrot.lane.b32.xlu0 %v612, 48
        %v1114 = vpop.permute.xlu0 %1113
        %v1118 = vsel %vm736, %v1110, 0
        %1120 = vmatprep.subr.mxu0 0.0
        %1121 = vmatpush1.msra.mxu0 %v1112
        %1122 = vmatprep.subr.mxu0 0.0
        %1123 = vmatpush1.msra.mxu0 %v1114
        %1124 = vmatprep.subr.mxu0 0.0
        %1125 = vmatpush1.msra.mxu0 0.0
        %1126 = vmatprep.subr.mxu0 0.0
        %1127 = vmatpush1.msra.mxu0 0.0
        %1128 = vmatprep.subr.mxu0 0.0
        %1129 = vmatpush1.msra.mxu0 0.0
        %1130 = vmatprep.subr.mxu0 0.0
        %1131 = vmatpush1.msra.mxu0 0.0
        %1132 = vmatprep.subr.mxu0 0.0
        %1133 = vmatpush1.msra.mxu0 0.0
        %1134 = vmatprep.subr.mxu0 0.0
        %1135 = vmatpush1.msra.mxu0 0.0
        %1136 = vmatprep.subr.mxu0 0.0
        %1137 = vmatpush1.msra.mxu0 0.0
        %1138 = vmatprep.subr.mxu0 0.0
        %1139 = vmatpush1.msra.mxu0 0.0
        %1140 = vmatprep.subr.mxu0 0.0
        %1141 = vmatpush1.msra.mxu0 0.0
        %1142 = vmatprep.subr.mxu0 0.0
        %1143 = vmatpush1.msra.mxu0 0.0
        %1144 = vmatprep.subr.mxu0 0.0
        %1145 = vmatpush1.msra.mxu0 0.0
        %1146 = vmatprep.subr.mxu0 0.0
        %1147 = vmatpush1.msra.mxu0 0.0
        %1148 = vmatprep.subr.mxu0 0.0
        %1149 = vmatpush1.msra.mxu0 0.0
        %1150 = vmatprep.subr.mxu0 0.0
        %1151 = vmatpush1.msra.mxu0 0.0
        %1152 = vmatprep.subr.mxu0 0.0
        %1153 = vmatpush1.msra.mxu0 0.0
        %1154 = vmatprep.subr.mxu0 0.0
        %1155 = vmatpush1.msra.mxu0 0.0
        %1156 = vmatprep.subr.mxu0 0.0
        %1157 = vmatpush1.msra.mxu0 0.0
        %1158 = vmatprep.subr.mxu0 0.0
        %1159 = vmatpush1.msra.mxu0 0.0
        %1160 = vmatprep.subr.mxu0 0.0
        %1161 = vmatpush1.msra.mxu0 0.0
        %1162 = vmatprep.subr.mxu0 0.0
        %1163 = vmatpush1.msra.mxu0 0.0
        %1164 = vmatprep.subr.mxu0 0.0
        %1165 = vmatpush1.msra.mxu0 0.0
        %1166 = vmatprep.subr.mxu0 0.0
        %1167 = vmatpush1.msra.mxu0 0.0
        %1168 = vmatprep.subr.mxu0 0.0
        %1169 = vmatpush1.msra.mxu0 0.0
        %1170 = vmatprep.subr.mxu0 0.0
        %1171 = vmatpush1.msra.mxu0 0.0
        %1172 = vmatprep.subr.mxu0 0.0
        %1173 = vmatpush1.msra.mxu0 0.0
        %1174 = vmatprep.subr.mxu0 0.0
        %1175 = vmatpush1.msra.mxu0 0.0
        %1176 = vmatprep.subr.mxu0 0.0
        %1177 = vmatpush1.msra.mxu0 0.0
        %1178 = vmatprep.subr.mxu0 0.0
        %1179 = vmatpush1.msra.mxu0 0.0
        %1180 = vmatprep.subr.mxu0 0.0
        %1181 = vmatpush1.msra.mxu0 0.0
        %1182 = vmatprep.subr.mxu0 0.0
        %1183 = vmatpush1.msra.mxu0 0.0
        %1184 = vmatprep.mubr.f32.mxu0 0.0
        %1185 = vmatmul.mubr.f32.gmra.mrb[0].mxu0 %v1118
        %v1186 = vpop.f32.mrb[0].mxu0
        %v1187 = vadd.f32 0.0, %v1186
        %v1188 = vpop.f32.mrb[0].mxu0
        %1189 = vdwg.mxu0
        %1190 = vrot.lane.b32.xlu0 %v615, 104
        %v1191 = vpop.permute.xlu0 %1190
        %1192 = vrot.lane.b32.xlu0 %v607, 72
        %v1193 = vpop.permute.xlu0 %1192
        %1194 = vrot.lane.b32.xlu0 %v612, 72
        %v1195 = vpop.permute.xlu0 %1194
        %v1196 = vsel %vm622, %v1191, 0
        %v1198 = vsel %vm622, %v1193, 0
        %v1200 = vsel %vm622, %v1195, 0
        %1202 = vmatprep.subr.mxu0 0.0
        %1203 = vmatpush1.xpose.msra.mxu0 %v1198
        %1204 = vmatprep.subr.mxu0 0.0
        %1205 = vmatpush1.xpose.msra.mxu0 %v1200
        %1206 = vmatprep.subr.mxu0 0.0
        %1207 = vmatpush1.xpose.msra.mxu0 0.0
        %1208 = vmatprep.subr.mxu0 0.0
        %1209 = vmatpush1.xpose.msra.mxu0 0.0
        %1210 = vmatprep.subr.mxu0 0.0
        %1211 = vmatpush1.xpose.msra.mxu0 0.0
        %1212 = vmatprep.subr.mxu0 0.0
        %1213 = vmatpush1.xpose.msra.mxu0 0.0
        %1214 = vmatprep.subr.mxu0 0.0
        %1215 = vmatpush1.xpose.msra.mxu0 0.0
        %1216 = vmatprep.subr.mxu0 0.0
        %1217 = vmatpush1.xpose.msra.mxu0 0.0
        %1218 = vmatprep.subr.mxu0 0.0
        %1219 = vmatpush1.xpose.msra.mxu0 0.0
        %1220 = vmatprep.subr.mxu0 0.0
        %1221 = vmatpush1.xpose.msra.mxu0 0.0
        %1222 = vmatprep.subr.mxu0 0.0
        %1223 = vmatpush1.xpose.msra.mxu0 0.0
        %1224 = vmatprep.subr.mxu0 0.0
        %1225 = vmatpush1.xpose.msra.mxu0 0.0
        %1226 = vmatprep.subr.mxu0 0.0
        %1227 = vmatpush1.xpose.msra.mxu0 0.0
        %1228 = vmatprep.subr.mxu0 0.0
        %1229 = vmatpush1.xpose.msra.mxu0 0.0
        %1230 = vmatprep.subr.mxu0 0.0
        %1231 = vmatpush1.xpose.msra.mxu0 0.0
        %1232 = vmatprep.subr.mxu0 0.0
        %1233 = vmatpush1.xpose.msra.mxu0 0.0
        %1234 = vmatprep.subr.mxu0 0.0
        %1235 = vmatpush1.xpose.msra.mxu0 0.0
        %1236 = vmatprep.subr.mxu0 0.0
        %1237 = vmatpush1.xpose.msra.mxu0 0.0
        %1238 = vmatprep.subr.mxu0 0.0
        %1239 = vmatpush1.xpose.msra.mxu0 0.0
        %1240 = vmatprep.subr.mxu0 0.0
        %1241 = vmatpush1.xpose.msra.mxu0 0.0
        %1242 = vmatprep.subr.mxu0 0.0
        %1243 = vmatpush1.xpose.msra.mxu0 0.0
        %1244 = vmatprep.subr.mxu0 0.0
        %1245 = vmatpush1.xpose.msra.mxu0 0.0
        %1246 = vmatprep.subr.mxu0 0.0
        %1247 = vmatpush1.xpose.msra.mxu0 0.0
        %1248 = vmatprep.subr.mxu0 0.0
        %1249 = vmatpush1.xpose.msra.mxu0 0.0
        %1250 = vmatprep.subr.mxu0 0.0
        %1251 = vmatpush1.xpose.msra.mxu0 0.0
        %1252 = vmatprep.subr.mxu0 0.0
        %1253 = vmatpush1.xpose.msra.mxu0 0.0
        %1254 = vmatprep.subr.mxu0 0.0
        %1255 = vmatpush1.xpose.msra.mxu0 0.0
        %1256 = vmatprep.subr.mxu0 0.0
        %1257 = vmatpush1.xpose.msra.mxu0 0.0
        %1258 = vmatprep.subr.mxu0 0.0
        %1259 = vmatpush1.xpose.msra.mxu0 0.0
        %1260 = vmatprep.subr.mxu0 0.0
        %1261 = vmatpush1.xpose.msra.mxu0 0.0
        %1262 = vmatprep.subr.mxu0 0.0
        %1263 = vmatpush1.xpose.msra.mxu0 0.0
        %1264 = vmatprep.subr.mxu0 0.0
        %1265 = vmatpush1.xpose.msra.mxu0 0.0
        %1266 = vmatprep.mubr.f32.mxu0 0.0
        %1267 = vmatmul.mubr.f32.gmra.mrb[0].mxu0 %v1196
        %v1268 = vpop.f32.mrb[0].mxu0
        %v1269 = vadd.f32 0.0, %v1268
        %v1270 = vpop.f32.mrb[0].mxu0
        %1271 = vdwg.mxu0
        %v1272 = vsel %vm622, %v1269, -inf
        %1273 = vmax.xlane.f32.xlu0 %v1272
        %v1274 = vpop.xlane.xlu0 %1273
        %v1275 = vsub.f32 %v1269, %v1274
        %v1276 = vmul.f32 %v1275, 1.442695
        %v1277 = vpow.pop %v1276
        %v1278 = vsel %vm706, %v1269, -inf
        %1279 = vmax.xlane.f32.xlu0 %v1278
        %v1280 = vpop.xlane.xlu0 %1279
        %v1281 = vsub.f32 %v1269, %v1280
        %v1282 = vmul.f32 %v1281, 1.442695
        %v1283 = vpow.pop %v1282
        %v1284 = vsel %vm622, %v1277, 0.0
        %1285 = vadd.xlane.f32.xlu0 %v1284
        %v1286 = vpop.xlane.xlu0 %1285
        %v1287 = vrcp.pop %v1286
        %v1288 = vmul.f32 %v1287, 0.5
        %v1289 = vmul.f32 %v1277, %v1288
        %1291 = vrot.lane.b32.xlu0 %v1283, 120
        %v1292 = vpop.permute.xlu0 %1291
        %v1294 = vsel %vm622, %v1292, 0.0
        %1295 = vadd.xlane.f32.xlu0 %v1294
        %v1296 = vpop.xlane.xlu0 %1295
        %v1297 = vrcp.pop %v1296
        %v1298 = vmul.f32 %v1297, 0.5
        %v1299 = vmul.f32 %v1283, %v1298
        %v1300 = vsel %vm622, %v1289, %v1299
        %1301 = vrot.lane.b32.xlu0 %v607, 40
        %v1302 = vpop.permute.xlu0 %1301
        %1303 = vrot.lane.b32.xlu0 %v612, 40
        %v1304 = vpop.permute.xlu0 %1303
        %v1308 = vsel %vm736, %v1300, 0
        %1310 = vmatprep.subr.mxu0 0.0
        %1311 = vmatpush1.msra.mxu0 %v1302
        %1312 = vmatprep.subr.mxu0 0.0
        %1313 = vmatpush1.msra.mxu0 %v1304
        %1314 = vmatprep.subr.mxu0 0.0
        %1315 = vmatpush1.msra.mxu0 0.0
        %1316 = vmatprep.subr.mxu0 0.0
        %1317 = vmatpush1.msra.mxu0 0.0
        %1318 = vmatprep.subr.mxu0 0.0
        %1319 = vmatpush1.msra.mxu0 0.0
        %1320 = vmatprep.subr.mxu0 0.0
        %1321 = vmatpush1.msra.mxu0 0.0
        %1322 = vmatprep.subr.mxu0 0.0
        %1323 = vmatpush1.msra.mxu0 0.0
        %1324 = vmatprep.subr.mxu0 0.0
        %1325 = vmatpush1.msra.mxu0 0.0
        %1326 = vmatprep.subr.mxu0 0.0
        %1327 = vmatpush1.msra.mxu0 0.0
        %1328 = vmatprep.subr.mxu0 0.0
        %1329 = vmatpush1.msra.mxu0 0.0
        %1330 = vmatprep.subr.mxu0 0.0
        %1331 = vmatpush1.msra.mxu0 0.0
        %1332 = vmatprep.subr.mxu0 0.0
        %1333 = vmatpush1.msra.mxu0 0.0
        %1334 = vmatprep.subr.mxu0 0.0
        %1335 = vmatpush1.msra.mxu0 0.0
        %1336 = vmatprep.subr.mxu0 0.0
        %1337 = vmatpush1.msra.mxu0 0.0
        %1338 = vmatprep.subr.mxu0 0.0
        %1339 = vmatpush1.msra.mxu0 0.0
        %1340 = vmatprep.subr.mxu0 0.0
        %1341 = vmatpush1.msra.mxu0 0.0
        %1342 = vmatprep.subr.mxu0 0.0
        %1343 = vmatpush1.msra.mxu0 0.0
        %1344 = vmatprep.subr.mxu0 0.0
        %1345 = vmatpush1.msra.mxu0 0.0
        %1346 = vmatprep.subr.mxu0 0.0
        %1347 = vmatpush1.msra.mxu0 0.0
        %1348 = vmatprep.subr.mxu0 0.0
        %1349 = vmatpush1.msra.mxu0 0.0
        %1350 = vmatprep.subr.mxu0 0.0
        %1351 = vmatpush1.msra.mxu0 0.0
        %1352 = vmatprep.subr.mxu0 0.0
        %1353 = vmatpush1.msra.mxu0 0.0
        %1354 = vmatprep.subr.mxu0 0.0
        %1355 = vmatpush1.msra.mxu0 0.0
        %1356 = vmatprep.subr.mxu0 0.0
        %1357 = vmatpush1.msra.mxu0 0.0
        %1358 = vmatprep.subr.mxu0 0.0
        %1359 = vmatpush1.msra.mxu0 0.0
        %1360 = vmatprep.subr.mxu0 0.0
        %1361 = vmatpush1.msra.mxu0 0.0
        %1362 = vmatprep.subr.mxu0 0.0
        %1363 = vmatpush1.msra.mxu0 0.0
        %1364 = vmatprep.subr.mxu0 0.0
        %1365 = vmatpush1.msra.mxu0 0.0
        %1366 = vmatprep.subr.mxu0 0.0
        %1367 = vmatpush1.msra.mxu0 0.0
        %1368 = vmatprep.subr.mxu0 0.0
        %1369 = vmatpush1.msra.mxu0 0.0
        %1370 = vmatprep.subr.mxu0 0.0
        %1371 = vmatpush1.msra.mxu0 0.0
        %1372 = vmatprep.subr.mxu0 0.0
        %1373 = vmatpush1.msra.mxu0 0.0
        %1374 = vmatprep.mubr.f32.mxu0 0.0
        %1375 = vmatmul.mubr.f32.gmra.mrb[0].mxu0 %v1308
        %v1376 = vpop.f32.mrb[0].mxu0
        %v1377 = vadd.f32 0.0, %v1376
        %v1378 = vpop.f32.mrb[0].mxu0
        %1379 = vdwg.mxu0
        %1381 = vrot.lane.b32.xlu0 %v997, 8
        %v1382 = vpop.permute.xlu0 %1381
        %1385 = vrot.lane.b32.xlu0 %v1187, 16
        %v1386 = vpop.permute.xlu0 %1385
        %1389 = vrot.lane.b32.xlu0 %v1377, 24
        %v1390 = vpop.permute.xlu0 %1389
        %v1392 = vsel %vm622, %v807, %v1382
        %v1393 = vsel %vm736, %v1392, %v1386
        %vm1394 = vcmask 195584
        %v1395 = vsel %vm1394, %v1393, %v1390
        %v1396 = vld [vmem:[%s4] sm:$0xff]
        %v1397 = vld [vmem:[%s4 + $0x8] sm:$0xff]
        %v1398 = vld [vmem:[%s4 + $0x10] sm:$0xff]
        %v1399 = vld [vmem:[%s4 + $0x18] sm:$0xff]
        %v1400 = vld [vmem:[%s5] sm:$0x1]
        %v1402 = vlaneseq
        %v1403 = vshrl.u32 %v1402, 7
        %v1404 = vsub.s32 0, %v1403
        %v1405 = vrot.slane %v1400, %v1404
        %v1408 = vsel %vm533, %v1395, 0
        %1410 = vmatprep.subr.mxu0 0.0
        %1411 = vmatpush1.msra.mxu0 %v1396
        %1412 = vmatprep.subr.mxu0 0.0
        %1413 = vmatpush1.msra.mxu0 %v1397
        %1414 = vmatprep.subr.mxu0 0.0
        %1415 = vmatpush1.msra.mxu0 %v1398
        %1416 = vmatprep.subr.mxu0 0.0
        %1417 = vmatpush1.msra.mxu0 %v1399
        %1418 = vmatprep.subr.mxu0 0.0
        %1419 = vmatpush1.msra.mxu0 0.0
        %1420 = vmatprep.subr.mxu0 0.0
        %1421 = vmatpush1.msra.mxu0 0.0
        %1422 = vmatprep.subr.mxu0 0.0
        %1423 = vmatpush1.msra.mxu0 0.0
        %1424 = vmatprep.subr.mxu0 0.0
        %1425 = vmatpush1.msra.mxu0 0.0
        %1426 = vmatprep.subr.mxu0 0.0
        %1427 = vmatpush1.msra.mxu0 0.0
        %1428 = vmatprep.subr.mxu0 0.0
        %1429 = vmatpush1.msra.mxu0 0.0
        %1430 = vmatprep.subr.mxu0 0.0
        %1431 = vmatpush1.msra.mxu0 0.0
        %1432 = vmatprep.subr.mxu0 0.0
        %1433 = vmatpush1.msra.mxu0 0.0
        %1434 = vmatprep.subr.mxu0 0.0
        %1435 = vmatpush1.msra.mxu0 0.0
        %1436 = vmatprep.subr.mxu0 0.0
        %1437 = vmatpush1.msra.mxu0 0.0
        %1438 = vmatprep.subr.mxu0 0.0
        %1439 = vmatpush1.msra.mxu0 0.0
        %1440 = vmatprep.subr.mxu0 0.0
        %1441 = vmatpush1.msra.mxu0 0.0
        %1442 = vmatprep.subr.mxu0 0.0
        %1443 = vmatpush1.msra.mxu0 0.0
        %1444 = vmatprep.subr.mxu0 0.0
        %1445 = vmatpush1.msra.mxu0 0.0
        %1446 = vmatprep.subr.mxu0 0.0
        %1447 = vmatpush1.msra.mxu0 0.0
        %1448 = vmatprep.subr.mxu0 0.0
        %1449 = vmatpush1.msra.mxu0 0.0
        %1450 = vmatprep.subr.mxu0 0.0
        %1451 = vmatpush1.msra.mxu0 0.0
        %1452 = vmatprep.subr.mxu0 0.0
        %1453 = vmatpush1.msra.mxu0 0.0
        %1454 = vmatprep.subr.mxu0 0.0
        %1455 = vmatpush1.msra.mxu0 0.0
        %1456 = vmatprep.subr.mxu0 0.0
        %1457 = vmatpush1.msra.mxu0 0.0
        %1458 = vmatprep.subr.mxu0 0.0
        %1459 = vmatpush1.msra.mxu0 0.0
        %1460 = vmatprep.subr.mxu0 0.0
        %1461 = vmatpush1.msra.mxu0 0.0
        %1462 = vmatprep.subr.mxu0 0.0
        %1463 = vmatpush1.msra.mxu0 0.0
        %1464 = vmatprep.subr.mxu0 0.0
        %1465 = vmatpush1.msra.mxu0 0.0
        %1466 = vmatprep.subr.mxu0 0.0
        %1467 = vmatpush1.msra.mxu0 0.0
        %1468 = vmatprep.subr.mxu0 0.0
        %1469 = vmatpush1.msra.mxu0 0.0
        %1470 = vmatprep.subr.mxu0 0.0
        %1471 = vmatpush1.msra.mxu0 0.0
        %1472 = vmatprep.subr.mxu0 0.0
        %1473 = vmatpush1.msra.mxu0 0.0
        %1474 = vmatprep.mubr.f32.mxu0 0.0
        %1475 = vmatmul.mubr.f32.gmra.mrb[0].mxu0 %v1408
        %v1476 = vpop.f32.mrb[0].mxu0
        %v1477 = vadd.f32 %v1405, %v1476
        %v1478 = vpop.f32.mrb[0].mxu0
        %1479 = vdwg.mxu0
        %v1480 = vadd.f32 %v520, %v1477
        %v1481 = vld [vmem:[%s10] sm:$0x1]
        %v1482 = vld [vmem:[%s11] sm:$0x1]
        %v1483 = vsel %vm533, %v1480, 0.0
        %1484 = vadd.xlane.f32.xlu0 %v1483
        %v1485 = vpop.xlane.xlu0 %1484
        %v1486 = vrcp.pop 32.0
        %v1487 = vmul.f32 %v1485, %v1486
        %v1488 = vsub.f32 %v1480, %v1487
        %v1489 = vmul.f32 %v1488, %v1488
        %v1490 = vsel %vm533, %v1489, 0.0
        %1491 = vadd.xlane.f32.xlu0 %v1490
        %v1492 = vpop.xlane.xlu0 %1491
        %v1493 = vmul.f32 %v1492, %v1486
        %v1494 = vadd.f32 %v1493, 1e-05
        %v1495 = vrsqrt.pop %v1494
        %v1496 = vmul.f32 %v1488, %v1495
        %v1498 = vlaneseq
        %v1499 = vshrl.u32 %v1498, 7
        %v1500 = vsub.s32 0, %v1499
        %v1501 = vrot.slane %v1481, %v1500
        %v1503 = vmul.f32 %v1496, %v1501
        %v1505 = vlaneseq
        %v1506 = vshrl.u32 %v1505, 7
        %v1507 = vsub.s32 0, %v1506
        %v1508 = vrot.slane %v1482, %v1507
        %v1510 = vadd.f32 %v1503, %v1508
        %v1511 = vld [vmem:[%s6] sm:$0xff]
        %v1512 = vld [vmem:[%s6 + $0x8] sm:$0xff]
        %v1513 = vld [vmem:[%s6 + $0x10] sm:$0xff]
        %v1514 = vld [vmem:[%s6 + $0x18] sm:$0xff]
        %v1515 = vld [vmem:[%s7] sm:$0x1]
        %v1517 = vlaneseq
        %v1518 = vshrl.u32 %v1517, 7
        %v1519 = vsub.s32 0, %v1518
        %v1520 = vrot.slane %v1515, %v1519
        %v1523 = vsel %vm533, %v1510, 0
        %1525 = vmatprep.subr.mxu0 0.0
        %1526 = vmatpush1.msra.mxu0 %v1511
        %1527 = vmatprep.subr.mxu0 0.0
        %1528 = vmatpush1.msra.mxu0 %v1512
        %1529 = vmatprep.subr.mxu0 0.0
        %1530 = vmatpush1.msra.mxu0 %v1513
        %1531 = vmatprep.subr.mxu0 0.0
        %1532 = vmatpush1.msra.mxu0 %v1514
        %1533 = vmatprep.subr.mxu0 0.0
        %1534 = vmatpush1.msra.mxu0 0.0
        %1535 = vmatprep.subr.mxu0 0.0
        %1536 = vmatpush1.msra.mxu0 0.0
        %1537 = vmatprep.subr.mxu0 0.0
        %1538 = vmatpush1.msra.mxu0 0.0
        %1539 = vmatprep.subr.mxu0 0.0
        %1540 = vmatpush1.msra.mxu0 0.0
        %1541 = vmatprep.subr.mxu0 0.0
        %1542 = vmatpush1.msra.mxu0 0.0
        %1543 = vmatprep.subr.mxu0 0.0
        %1544 = vmatpush1.msra.mxu0 0.0
        %1545 = vmatprep.subr.mxu0 0.0
        %1546 = vmatpush1.msra.mxu0 0.0
        %1547 = vmatprep.subr.mxu0 0.0
        %1548 = vmatpush1.msra.mxu0 0.0
        %1549 = vmatprep.subr.mxu0 0.0
        %1550 = vmatpush1.msra.mxu0 0.0
        %1551 = vmatprep.subr.mxu0 0.0
        %1552 = vmatpush1.msra.mxu0 0.0
        %1553 = vmatprep.subr.mxu0 0.0
        %1554 = vmatpush1.msra.mxu0 0.0
        %1555 = vmatprep.subr.mxu0 0.0
        %1556 = vmatpush1.msra.mxu0 0.0
        %1557 = vmatprep.subr.mxu0 0.0
        %1558 = vmatpush1.msra.mxu0 0.0
        %1559 = vmatprep.subr.mxu0 0.0
        %1560 = vmatpush1.msra.mxu0 0.0
        %1561 = vmatprep.subr.mxu0 0.0
        %1562 = vmatpush1.msra.mxu0 0.0
        %1563 = vmatprep.subr.mxu0 0.0
        %1564 = vmatpush1.msra.mxu0 0.0
        %1565 = vmatprep.subr.mxu0 0.0
        %1566 = vmatpush1.msra.mxu0 0.0
        %1567 = vmatprep.subr.mxu0 0.0
        %1568 = vmatpush1.msra.mxu0 0.0
        %1569 = vmatprep.subr.mxu0 0.0
        %1570 = vmatpush1.msra.mxu0 0.0
        %1571 = vmatprep.subr.mxu0 0.0
        %1572 = vmatpush1.msra.mxu0 0.0
        %1573 = vmatprep.subr.mxu0 0.0
        %1574 = vmatpush1.msra.mxu0 0.0
        %1575 = vmatprep.subr.mxu0 0.0
        %1576 = vmatpush1.msra.mxu0 0.0
        %1577 = vmatprep.subr.mxu0 0.0
        %1578 = vmatpush1.msra.mxu0 0.0
        %1579 = vmatprep.subr.mxu0 0.0
        %1580 = vmatpush1.msra.mxu0 0.0
        %1581 = vmatprep.subr.mxu0 0.0
        %1582 = vmatpush1.msra.mxu0 0.0
        %1583 = vmatprep.subr.mxu0 0.0
        %1584 = vmatpush1.msra.mxu0 0.0
        %1585 = vmatprep.subr.mxu0 0.0
        %1586 = vmatpush1.msra.mxu0 0.0
        %1587 = vmatprep.subr.mxu0 0.0
        %1588 = vmatpush1.msra.mxu0 0.0
        %1589 = vmatprep.mubr.f32.mxu0 0.0
        %1590 = vmatmul.mubr.f32.gmra.mrb[0].mxu0 %v1523
        %v1591 = vpop.f32.mrb[0].mxu0
        %v1592 = vadd.f32 %v1520, %v1591
        %v1593 = vpop.f32.mrb[0].mxu0
        %1594 = vdwg.mxu0
        %v1595 = vmax.f32 %v1592, 0.0
        %v1596 = vld [vmem:[%s8] sm:$0xff]
        %v1597 = vld [vmem:[%s8 + $0x8] sm:$0xff]
        %v1598 = vld [vmem:[%s8 + $0x10] sm:$0xff]
        %v1599 = vld [vmem:[%s8 + $0x18] sm:$0xff]
        %v1600 = vld [vmem:[%s8 + $0x20] sm:$0xff]
        %v1601 = vld [vmem:[%s8 + $0x28] sm:$0xff]
        %v1602 = vld [vmem:[%s8 + $0x30] sm:$0xff]
        %v1603 = vld [vmem:[%s8 + $0x38] sm:$0xff]
        %v1604 = vld [vmem:[%s9] sm:$0x1]
        %v1606 = vlaneseq
        %v1607 = vshrl.u32 %v1606, 7
        %v1608 = vsub.s32 0, %v1607
        %v1609 = vrot.slane %v1604, %v1608
        %vm1611 = vcmask 523264
        %v1613 = vsel %vm1611, %v1595, 0
        %1615 = vmatprep.subr.mxu0 0.0
        %1616 = vmatpush1.msra.mxu0 %v1596
        %1617 = vmatprep.subr.mxu0 0.0
        %1618 = vmatpush1.msra.mxu0 %v1597
        %1619 = vmatprep.subr.mxu0 0.0
        %1620 = vmatpush1.msra.mxu0 %v1598
        %1621 = vmatprep.subr.mxu0 0.0
        %1622 = vmatpush1.msra.mxu0 %v1599
        %1623 = vmatprep.subr.mxu0 0.0
        %1624 = vmatpush1.msra.mxu0 %v1600
        %1625 = vmatprep.subr.mxu0 0.0
        %1626 = vmatpush1.msra.mxu0 %v1601
        %1627 = vmatprep.subr.mxu0 0.0
        %1628 = vmatpush1.msra.mxu0 %v1602
        %1629 = vmatprep.subr.mxu0 0.0
        %1630 = vmatpush1.msra.mxu0 %v1603
        %1631 = vmatprep.subr.mxu0 0.0
        %1632 = vmatpush1.msra.mxu0 0.0
        %1633 = vmatprep.subr.mxu0 0.0
        %1634 = vmatpush1.msra.mxu0 0.0
        %1635 = vmatprep.subr.mxu0 0.0
        %1636 = vmatpush1.msra.mxu0 0.0
        %1637 = vmatprep.subr.mxu0 0.0
        %1638 = vmatpush1.msra.mxu0 0.0
        %1639 = vmatprep.subr.mxu0 0.0
        %1640 = vmatpush1.msra.mxu0 0.0
        %1641 = vmatprep.subr.mxu0 0.0
        %1642 = vmatpush1.msra.mxu0 0.0
        %1643 = vmatprep.subr.mxu0 0.0
        %1644 = vmatpush1.msra.mxu0 0.0
        %1645 = vmatprep.subr.mxu0 0.0
        %1646 = vmatpush1.msra.mxu0 0.0
        %1647 = vmatprep.subr.mxu0 0.0
        %1648 = vmatpush1.msra.mxu0 0.0
        %1649 = vmatprep.subr.mxu0 0.0
        %1650 = vmatpush1.msra.mxu0 0.0
        %1651 = vmatprep.subr.mxu0 0.0
        %1652 = vmatpush1.msra.mxu0 0.0
        %1653 = vmatprep.subr.mxu0 0.0
        %1654 = vmatpush1.msra.mxu0 0.0
        %1655 = vmatprep.subr.mxu0 0.0
        %1656 = vmatpush1.msra.mxu0 0.0
        %1657 = vmatprep.subr.mxu0 0.0
        %1658 = vmatpush1.msra.mxu0 0.0
        %1659 = vmatprep.subr.mxu0 0.0
        %1660 = vmatpush1.msra.mxu0 0.0
        %1661 = vmatprep.subr.mxu0 0.0
        %1662 = vmatpush1.msra.mxu0 0.0
        %1663 = vmatprep.subr.mxu0 0.0
        %1664 = vmatpush1.msra.mxu0 0.0
        %1665 = vmatprep.subr.mxu0 0.0
        %1666 = vmatpush1.msra.mxu0 0.0
        %1667 = vmatprep.subr.mxu0 0.0
        %1668 = vmatpush1.msra.mxu0 0.0
        %1669 = vmatprep.subr.mxu0 0.0
        %1670 = vmatpush1.msra.mxu0 0.0
        %1671 = vmatprep.subr.mxu0 0.0
        %1672 = vmatpush1.msra.mxu0 0.0
        %1673 = vmatprep.subr.mxu0 0.0
        %1674 = vmatpush1.msra.mxu0 0.0
        %1675 = vmatprep.subr.mxu0 0.0
        %1676 = vmatpush1.msra.mxu0 0.0
        %1677 = vmatprep.subr.mxu0 0.0
        %1678 = vmatpush1.msra.mxu0 0.0
        %1679 = vmatprep.mubr.f32.mxu0 0.0
        %1680 = vmatmul.mubr.f32.gmra.mrb[0].mxu0 %v1613
        %v1681 = vpop.f32.mrb[0].mxu0
        %v1682 = vadd.f32 %v1609, %v1681
        %v1683 = vpop.f32.mrb[0].mxu0
        %1684 = vdwg.mxu0
        %v1685 = vadd.f32 %v1510, %v1682
        %v1686 = vld [vmem:[%s12] sm:$0x1]
        %v1687 = vld [vmem:[%s13] sm:$0x1]
        %v1688 = vsel %vm533, %v1685, 0.0
        %1689 = vadd.xlane.f32.xlu0 %v1688
        %v1690 = vpop.xlane.xlu0 %1689
        %v1691 = vmul.f32 %v1690, %v1486
        %v1692 = vsub.f32 %v1685, %v1691
        %v1693 = vmul.f32 %v1692, %v1692
        %v1694 = vsel %vm533, %v1693, 0.0
        %1695 = vadd.xlane.f32.xlu0 %v1694
        %v1696 = vpop.xlane.xlu0 %1695
        %v1697 = vmul.f32 %v1696, %v1486
        %v1698 = vadd.f32 %v1697, 1e-05
        %v1699 = vrsqrt.pop %v1698
        %v1700 = vmul.f32 %v1692, %v1699
        %v1702 = vlaneseq
        %v1703 = vshrl.u32 %v1702, 7
        %v1704 = vsub.s32 0, %v1703
        %v1705 = vrot.slane %v1686, %v1704
        %v1707 = vmul.f32 %v1700, %v1705
        %v1709 = vlaneseq
        %v1710 = vshrl.u32 %v1709, 7
        %v1711 = vsub.s32 0, %v1710
        %v1712 = vrot.slane %v1687, %v1711
        %v1714 = vadd.f32 %v1707, %v1712
        %1715 = vst.msk [vmem:[%s519] sm:$0xff] %vm533, %v1714
        %s1716 = sand.u32 %s346, 1
        %s1717 = scalar_lea.sflag [#allocation4], %s1716
        %s1718 = sand.u32 %s346, 1
        %s1719 = smul.addr %s1718, 8
        %s1720 = scalar_lea.vmem [#allocation7], %s1719
        // Predicated region
        $region85: #{tpu_custom_call.1} parent=75 // pred_check
          %p1721 = pneg %p356
        $region86: #{tpu_custom_call.1} parent=75 // pred_check_branch
          %1723 = sbr.rel (%p1721) target = $region88
        $region87: #{tpu_custom_call.1} parent=75 // pred_region
          %s1725 = ssub.s32 128, 128
          %1726 = vsyncadd %s1717, %s1725
          %s1727 = smul.addr %s34, 128
          %s1728 = scalar_lea.hbm %s14, %s1727
          %s1730 = sshll.u32 %s1720, 4
          %s1731 = int_to_ptr.vmem [resolvable:$true] %s1730
          %1733 = dma.vmem_to_hbm [thread:$0]  %s1731, 128, %s1728, %s1717
        $region88: #{tpu_custom_call.1} parent=75 // pred_fallthru
          _
      $region76: #{tpu_custom_call.1} parent=5 // pred_fallthru
        _
      %p1734 = scmp.le.s32.totalorder 2, %s29
      // Predicated region
      $region89: #{tpu_custom_call.1} parent=5 // pred_check
        %p1735 = pneg %p1734
      $region90: #{tpu_custom_call.1} parent=5 // pred_check_branch
        %1737 = sbr.rel (%p1735) target = $region92
      $region91: #{tpu_custom_call.1} parent=5 // pred_region
        %s1738 = ssub.s32 %s29, 2
        // Predicated region
        $region93: #{tpu_custom_call.1} parent=91 // pred_check
          %p1739 = pneg %p362
        $region94: #{tpu_custom_call.1} parent=91 // pred_check_branch
          %1741 = sbr.rel (%p1739) target = $region96
        $region95: #{tpu_custom_call.1} parent=91 // pred_region
          %s1742 = sand.u32 %s347, 1
          %s1743 = scalar_lea.sflag [#allocation4], %s1742
          %s1744 = sand.u32 %s347, 1
          %s1745 = smul.addr %s1744, 8
          %s1746 = scalar_lea.vmem [#allocation7], %s1745
          %1747 = dma.done %s1743, 128
        $region96: #{tpu_custom_call.1} parent=91 // pred_fallthru
          _
      $region92: #{tpu_custom_call.1} parent=5 // pred_fallthru
        _
    $region6: #{tpu_custom_call.1} parent=1 // loop_footer
      %s33 = sadd.s32 1, %s29
    $region7: #{tpu_custom_call.1} parent=1 // loop_footer_branch
      %28 = sbr.rel target = $region3
    $region8: #{tpu_custom_call.1} parent=1 // loop_exit
      _
    %1748 = vsyncpa [#allocation3], 1
    %s1749 = scalar_lea.sflag [#allocation3], 1
    %1750 = vsyncpa %s1749, 1
    %1751 = vsyncpa [#allocation6], 1
    %s1752 = scalar_lea.sflag [#allocation6], 1
    %1753 = vsyncpa %s1752, 1
    %1754 = vsyncpa [#allocation4], 1
    %s1755 = scalar_lea.sflag [#allocation4], 1
    %1756 = vsyncpa %s1755, 1

</llo_original>
